<compile_context>
chip_gen: v7x
topology: tpu7x:2x2x1
jax: 0.10.0
libtpu: 0.0.40
codegen_flags: <defaults>
</compile_context>

<pallas_src>
import functools

import jax
import jax.numpy as jnp
from jax.experimental import pallas as pl
from jax.experimental.pallas import tpu as pltpu


def _round_up(n, m):
    return ((n + m - 1) // m) * m


def hit_order_kernel(x_ref, w1_ref, b1_ref, w2_ref, b2_ref,
                     w3_ref, b3_ref, w4_ref, b4_ref, o_ref):
    bf16 = jnp.bfloat16
    f32 = jnp.float32

    # Layer 1: Linear(D, 512) + ReLU.   (Dropout(0.3) = identity at inference.)
    h = jnp.dot(x_ref[...].astype(bf16), w1_ref[...], preferred_element_type=f32)
    h = jnp.maximum(h.astype(bf16) + b1_ref[...], 0)          # bf16 epilogue (v6e/v7x VALU)

    # Layer 2: Linear(512, 256) + ReLU. (Dropout identity.)
    h = jnp.dot(h, w2_ref[...], preferred_element_type=f32)
    h = jnp.maximum(h.astype(bf16) + b2_ref[...], 0)          # bf16 epilogue

    # Layer 3: Linear(256, 64) + ReLU.  f32 epilogue; feeds the f32 layer-4 contraction.
    h = jnp.dot(h, w3_ref[...], preferred_element_type=f32)
    h = jnp.maximum(h + b3_ref[...], 0.0)                      # (TB, 64) f32

    # Layer 4: Linear(64, 1) + Sigmoid, produced directly in a lane-dense layout:
    # (1, 64) @ (64, TB) -> (1, TB).  The h^T transpose rides the XLU (slack here),
    # and the store is contiguous full-lane vregs instead of masked per-row stores.
    logits = jnp.dot(w4_ref[...], h.T, preferred_element_type=f32) + b4_ref[...]
    o_ref[0] = jax.nn.sigmoid(logits).astype(o_ref.dtype)      # (1, TB) row


@functools.partial(jax.jit, static_argnames=("block_b",))
def hit_order_classifier(x, params, *, block_b=2048):
    """x: (B, input_size) float32. params: dict of (W_i, b_i), W stored as (in, out)."""
    B, D = x.shape
    f32, bf16 = jnp.float32, jnp.bfloat16

    # Cast the MXU weights to bf16 once outside the kernel; bf16 biases for the
    # bf16 epilogues.  Layer-3/4 params stay f32.
    w1 = params["w1"].astype(bf16); b1 = params["b1"].astype(bf16)
    w2 = params["w2"].astype(bf16); b2 = params["b2"].astype(bf16)
    w3 = params["w3"].astype(bf16); b3 = params["b3"].astype(f32)
    w4 = params["w4"].reshape(1, -1).astype(f32)               # (1, 64) row
    b4 = params["b4"].reshape(1, 1).astype(f32)                # (1, 1)

    # Batch tiling: TB is a multiple of 128 (one lane-dense output row per 128 batch
    # rows), capped at block_b; once there is enough work we force >=2 grid steps so
    # the "parallel" batch axis can feed both v7x TensorCores.
    LANE = 128
    Bm = _round_up(B, LANE)
    n_blk = pl.cdiv(Bm, block_b)
    if n_blk == 1 and Bm >= 2 * 1024:
        n_blk = 2
    TB = _round_up(pl.cdiv(Bm, n_blk), LANE)
    grid_n = pl.cdiv(Bm, TB)
    Bp = grid_n * TB
    xp = x if Bp == B else jnp.pad(x, ((0, Bp - B), (0, 0)))
    # TODO(synk): for very large ragged B, mask the last partial tile instead of the
    # jnp.pad copy of x (pad here is <= TB-1+127 rows, but the copy touches all of x).

    const = lambda a: pl.BlockSpec(a.shape, lambda i: (0,) * a.ndim)  # VMEM-resident

    # Explicit scoped-VMEM budget (v5e's default limit is only 16 MiB):
    # double-buffered x/out tiles + resident weights + f32/bf16 activation temporaries.
    Dp = _round_up(D, LANE)
    est = (2 * TB * Dp * 4                       # x tile (f32, lane-padded), 2 buffers
           + 2 * TB * 4                          # out tile, 2 buffers
           + 2 * (w1.size + w2.size + w3.size) * 2 + (1 << 20)
           + TB * (512 * 6 + 256 * 6 + 128 * 4 + 128 * 4))   # h1/h2 f32+bf16, h3, h3^T
    vmem_limit = int(min(64 << 20, max(32 << 20, 2 * est)))

    flops = 2 * Bp * (D * 512 + 512 * 256 + 256 * 64 + 64)
    bytes_accessed = (xp.size * 4
                      + (w1.size + w2.size + w3.size + b1.size + b2.size) * 2
                      + (b3.size + w4.size + b4.size) * 4
                      + Bp * 4)

    out = pl.pallas_call(
        hit_order_kernel,
        out_shape=jax.ShapeDtypeStruct((grid_n, 1, TB), f32),   # lane-dense output slab
        grid=(grid_n,),
        in_specs=[pl.BlockSpec((TB, D), lambda i: (i, 0)),
                  const(w1), const(b1),
                  const(w2), const(b2),
                  const(w3), const(b3),
                  const(w4), const(b4)],
        out_specs=pl.BlockSpec((1, 1, TB), lambda i: (i, 0, 0)),
        compiler_params=pltpu.CompilerParams(
            dimension_semantics=("parallel",),
            vmem_limit_bytes=vmem_limit),
        cost_estimate=pl.CostEstimate(
            flops=int(flops),
            transcendentals=int(Bp),
            bytes_accessed=int(bytes_accessed)),
    )(xp, w1, b1, w2, b2, w3, b3, w4, b4)

    return out.reshape(-1, 1)[:B]


def init_params(key, input_size):
    """Deterministic init matching the PyTorch layer shapes (uniform +/- 1/sqrt(fan_in)).
    Weights stored as (in_features, out_features), i.e. transposed vs. PyTorch."""
    dims = [(input_size, 512), (512, 256), (256, 64), (64, 1)]
    params = {}
    for i, (fan_in, fan_out) in enumerate(dims, start=1):
        key, kw, kb = jax.random.split(key, 3)
        bound = 1.0 / (fan_in ** 0.5)
        params[f"w{i}"] = jax.random.uniform(
            kw, (fan_in, fan_out), jnp.float32, -bound, bound)
        params[f"b{i}"] = jax.random.uniform(
            kb, (1, fan_out), jnp.float32, -bound, bound)
    return params


@jax.jit
def reference_forward(x, params):
    """Pure-JAX reference mirroring the kernel numerics (bf16 MXU operands,
    bf16 epilogues on layers 1-2, f32 layers 3-4)."""
    bf = jnp.bfloat16
    f32 = jnp.float32
    h = jnp.dot(x.astype(bf), params["w1"].astype(bf), preferred_element_type=f32)
    h = jnp.maximum(h.astype(bf) + params["b1"].astype(bf), 0)
    h = jnp.dot(h, params["w2"].astype(bf), preferred_element_type=f32)
    h = jnp.maximum(h.astype(bf) + params["b2"].astype(bf), 0)
    h = jnp.dot(h, params["w3"].astype(bf), preferred_element_type=f32)
    h = jnp.maximum(h + params["b3"], 0.0)
    logits = h @ params["w4"].reshape(-1, 1) + params["b4"].reshape(1, 1)
    return jax.nn.sigmoid(logits)


if __name__ == "__main__":
    key = jax.random.PRNGKey(0)
    key, kx1, kx2, kx3 = jax.random.split(key, 4)

    input_size = 32
    params = init_params(key, input_size)

    # Small batch (single tile).
    x = jax.random.normal(kx1, (8, input_size), jnp.float32)
    out = jax.block_until_ready(hit_order_classifier(x, params))
    ref = reference_forward(x, params)
    assert out.shape == (8, 1), out.shape
    assert jnp.allclose(out, ref, atol=1e-3, rtol=1e-3), "mismatch vs pure-JAX reference"

    # Ragged batch (exercises the pad-to-tile path).
    x2 = jax.random.normal(kx2, (20, input_size), jnp.float32)
    out2 = jax.block_until_ready(hit_order_classifier(x2, params))
    ref2 = reference_forward(x2, params)
    assert out2.shape == (20, 1), out2.shape
    assert jnp.allclose(out2, ref2, atol=1e-3, rtol=1e-3), "mismatch (ragged batch)"

    # Multi-tile grid (exercises the pipelined batch tiling + lane-dense output assembly).
    x3 = jax.random.normal(kx3, (300, input_size), jnp.float32)
    out3 = jax.block_until_ready(hit_order_classifier(x3, params, block_b=128))
    ref3 = reference_forward(x3, params)
    assert out3.shape == (300, 1), out3.shape
    assert jnp.allclose(out3, ref3, atol=1e-3, rtol=1e-3), "mismatch (multi-tile grid)"

    print("KERNEL_OK")
</pallas_src>

<mosaic_0001>
module attributes {stable_mosaic.version = 11 : i64} {
  func.func @hit_order_kernel(%arg0: i32, %arg1: memref<128x32xf32, #tpu.memory_space<vmem>>, %arg2: memref<32x512xbf16, #tpu.memory_space<vmem>>, %arg3: memref<1x512xbf16, #tpu.memory_space<vmem>>, %arg4: memref<512x256xbf16, #tpu.memory_space<vmem>>, %arg5: memref<1x256xbf16, #tpu.memory_space<vmem>>, %arg6: memref<256x64xbf16, #tpu.memory_space<vmem>>, %arg7: memref<1x64xf32, #tpu.memory_space<vmem>>, %arg8: memref<1x64xf32, #tpu.memory_space<vmem>>, %arg9: memref<1x1xf32, #tpu.memory_space<vmem>>, %arg10: memref<1x1x128xf32, #tpu.memory_space<vmem>>) attributes {dimension_semantics = [#tpu.dimension_semantics<parallel>], iteration_bounds = array<i64: 1>, scalar_prefetch = 0 : i64, scratch_operands = 0 : i64, tpu.core_type = #tpu.core_type<tc>, window_params = [{transform_indices = @transform_0, window_bounds = array<i64: 128, 32>}, {pipeline_mode = #tpu.pipeline_mode<synchronous>, transform_indices = @transform_1, window_bounds = array<i64: 32, 512>}, {pipeline_mode = #tpu.pipeline_mode<synchronous>, transform_indices = @transform_2, window_bounds = array<i64: 1, 512>}, {pipeline_mode = #tpu.pipeline_mode<synchronous>, transform_indices = @transform_3, window_bounds = array<i64: 512, 256>}, {pipeline_mode = #tpu.pipeline_mode<synchronous>, transform_indices = @transform_4, window_bounds = array<i64: 1, 256>}, {pipeline_mode = #tpu.pipeline_mode<synchronous>, transform_indices = @transform_5, window_bounds = array<i64: 256, 64>}, {pipeline_mode = #tpu.pipeline_mode<synchronous>, transform_indices = @transform_6, window_bounds = array<i64: 1, 64>}, {pipeline_mode = #tpu.pipeline_mode<synchronous>, transform_indices = @transform_7, window_bounds = array<i64: 1, 64>}, {pipeline_mode = #tpu.pipeline_mode<synchronous>, transform_indices = @transform_8, window_bounds = array<i64: 1, 1>}, {transform_indices = @transform_9, window_bounds = array<i64: 1, 1, 128>}]} {
    %c0 = arith.constant 0 : index
    %c0_0 = arith.constant 0 : index
    %0 = vector.load %arg1[%c0, %c0_0] : memref<128x32xf32, #tpu.memory_space<vmem>>, vector<128x32xf32>
    %1 = arith.truncf %0 : vector<128x32xf32> to vector<128x32xbf16>
    %c0_1 = arith.constant 0 : index
    %c0_2 = arith.constant 0 : index
    %2 = vector.load %arg2[%c0_1, %c0_2] : memref<32x512xbf16, #tpu.memory_space<vmem>>, vector<32x512xbf16>
    %cst = arith.constant dense<0.000000e+00> : vector<128x512xf32>
    %3 = tpu.matmul %1, %2, %cst {dimension_numbers = #tpu.dot_dimension_numbers<[1], [0], [0], [1], [0, 0, 1, 1], [], []>} : vector<128x32xbf16>, vector<32x512xbf16>, vector<128x512xf32> -> vector<128x512xf32>
    %4 = arith.truncf %3 : vector<128x512xf32> to vector<128x512xbf16>
    %c0_3 = arith.constant 0 : index
    %c0_4 = arith.constant 0 : index
    %5 = vector.load %arg3[%c0_3, %c0_4] : memref<1x512xbf16, #tpu.memory_space<vmem>>, vector<1x512xbf16>
    %6 = vector.broadcast %5 : vector<1x512xbf16> to vector<128x512xbf16>
    %7 = arith.addf %4, %6 : vector<128x512xbf16>
    %cst_5 = arith.constant 0.000000e+00 : bf16
    %8 = vector.broadcast %cst_5 : bf16 to vector<128x512xbf16>
    %9 = arith.maximumf %7, %8 : vector<128x512xbf16>
    %c0_6 = arith.constant 0 : index
    %c0_7 = arith.constant 0 : index
    %10 = vector.load %arg4[%c0_6, %c0_7] : memref<512x256xbf16, #tpu.memory_space<vmem>>, vector<512x256xbf16>
    %cst_8 = arith.constant dense<0.000000e+00> : vector<128x256xf32>
    %11 = tpu.matmul %9, %10, %cst_8 {dimension_numbers = #tpu.dot_dimension_numbers<[1], [0], [0], [1], [0, 0, 1, 1], [], []>} : vector<128x512xbf16>, vector<512x256xbf16>, vector<128x256xf32> -> vector<128x256xf32>
    %12 = arith.truncf %11 : vector<128x256xf32> to vector<128x256xbf16>
    %c0_9 = arith.constant 0 : index
    %c0_10 = arith.constant 0 : index
    %13 = vector.load %arg5[%c0_9, %c0_10] : memref<1x256xbf16, #tpu.memory_space<vmem>>, vector<1x256xbf16>
    %14 = vector.broadcast %13 : vector<1x256xbf16> to vector<128x256xbf16>
    %15 = arith.addf %12, %14 : vector<128x256xbf16>
    %cst_11 = arith.constant 0.000000e+00 : bf16
    %16 = vector.broadcast %cst_11 : bf16 to vector<128x256xbf16>
    %17 = arith.maximumf %15, %16 : vector<128x256xbf16>
    %c0_12 = arith.constant 0 : index
    %c0_13 = arith.constant 0 : index
    %18 = vector.load %arg6[%c0_12, %c0_13] : memref<256x64xbf16, #tpu.memory_space<vmem>>, vector<256x64xbf16>
    %cst_14 = arith.constant dense<0.000000e+00> : vector<128x64xf32>
    %19 = tpu.matmul %17, %18, %cst_14 {dimension_numbers = #tpu.dot_dimension_numbers<[1], [0], [0], [1], [0, 0, 1, 1], [], []>} : vector<128x256xbf16>, vector<256x64xbf16>, vector<128x64xf32> -> vector<128x64xf32>
    %c0_15 = arith.constant 0 : index
    %c0_16 = arith.constant 0 : index
    %20 = vector.load %arg7[%c0_15, %c0_16] : memref<1x64xf32, #tpu.memory_space<vmem>>, vector<1x64xf32>
    %21 = vector.broadcast %20 : vector<1x64xf32> to vector<128x64xf32>
    %22 = arith.addf %19, %21 : vector<128x64xf32>
    %cst_17 = arith.constant 0.000000e+00 : f32
    %23 = vector.broadcast %cst_17 : f32 to vector<128x64xf32>
    %24 = arith.maximumf %22, %23 : vector<128x64xf32>
    %c0_18 = arith.constant 0 : index
    %c0_19 = arith.constant 0 : index
    %25 = vector.load %arg8[%c0_18, %c0_19] : memref<1x64xf32, #tpu.memory_space<vmem>>, vector<1x64xf32>
    %26 = tpu.transpose %24, [1, 0] : vector<128x64xf32> -> vector<64x128xf32>
    %cst_20 = arith.constant dense<0.000000e+00> : vector<1x128xf32>
    %27 = tpu.matmul %25, %26, %cst_20 {dimension_numbers = #tpu.dot_dimension_numbers<[1], [0], [0], [1], [0, 0, 1, 1], [], []>} : vector<1x64xf32>, vector<64x128xf32>, vector<1x128xf32> -> vector<1x128xf32>
    %c0_21 = arith.constant 0 : index
    %c0_22 = arith.constant 0 : index
    %28 = vector.load %arg9[%c0_21, %c0_22] : memref<1x1xf32, #tpu.memory_space<vmem>>, vector<1x1xf32>
    %29 = vector.broadcast %28 : vector<1x1xf32> to vector<1x128xf32>
    %30 = arith.addf %27, %29 : vector<1x128xf32>
    %31 = arith.negf %30 : vector<1x128xf32>
    %32 = math.exp %31 : vector<1x128xf32>
    %cst_23 = arith.constant 1.000000e+00 : f32
    %33 = vector.broadcast %cst_23 : f32 to vector<1x128xf32>
    %34 = arith.addf %33, %32 : vector<1x128xf32>
    %35 = arith.divf %33, %34 : vector<1x128xf32>
    %c0_24 = arith.constant 0 : index
    %c0_25 = arith.constant 0 : index
    %c0_26 = arith.constant 0 : index
    %36 = vector.load %arg10[%c0_24, %c0_25, %c0_26] : memref<1x1x128xf32, #tpu.memory_space<vmem>>, vector<1x1x128xf32>
    %37 = vector.shape_cast %36 : vector<1x1x128xf32> to vector<1x128xf32>
    %38 = vector.shape_cast %35 : vector<1x128xf32> to vector<1x1x128xf32>
    tpu.vector_store %arg10[%c0_24, %c0_25, %c0_26], %38 {strides = array<i32>} : memref<1x1x128xf32, #tpu.memory_space<vmem>>, vector<1x1x128xf32>,
    return
  }
  func.func @transform_0(%arg0: i32) -> (i32, i32) {
    %c0_i32 = arith.constant 0 : i32
    %c0_i32_0 = arith.constant 0 : i32
    return %arg0, %c0_i32 : i32, i32
  }
  func.func @transform_1(%arg0: i32) -> (i32, i32) {
    %c0_i32 = arith.constant 0 : i32
    %c0_i32_0 = arith.constant 0 : i32
    %c0_i32_1 = arith.constant 0 : i32
    return %c0_i32, %c0_i32_0 : i32, i32
  }
  func.func @transform_2(%arg0: i32) -> (i32, i32) {
    %c0_i32 = arith.constant 0 : i32
    %c0_i32_0 = arith.constant 0 : i32
    %c0_i32_1 = arith.constant 0 : i32
    return %c0_i32, %c0_i32_0 : i32, i32
  }
  func.func @transform_3(%arg0: i32) -> (i32, i32) {
    %c0_i32 = arith.constant 0 : i32
    %c0_i32_0 = arith.constant 0 : i32
    %c0_i32_1 = arith.constant 0 : i32
    return %c0_i32, %c0_i32_0 : i32, i32
  }
  func.func @transform_4(%arg0: i32) -> (i32, i32) {
    %c0_i32 = arith.constant 0 : i32
    %c0_i32_0 = arith.constant 0 : i32
    %c0_i32_1 = arith.constant 0 : i32
    return %c0_i32, %c0_i32_0 : i32, i32
  }
  func.func @transform_5(%arg0: i32) -> (i32, i32) {
    %c0_i32 = arith.constant 0 : i32
    %c0_i32_0 = arith.constant 0 : i32
    %c0_i32_1 = arith.constant 0 : i32
    return %c0_i32, %c0_i32_0 : i32, i32
  }
  func.func @transform_6(%arg0: i32) -> (i32, i32) {
    %c0_i32 = arith.constant 0 : i32
    %c0_i32_0 = arith.constant 0 : i32
    %c0_i32_1 = arith.constant 0 : i32
    return %c0_i32, %c0_i32_0 : i32, i32
  }
  func.func @transform_7(%arg0: i32) -> (i32, i32) {
    %c0_i32 = arith.constant 0 : i32
    %c0_i32_0 = arith.constant 0 : i32
    %c0_i32_1 = arith.constant 0 : i32
    return %c0_i32, %c0_i32_0 : i32, i32
  }
  func.func @transform_8(%arg0: i32) -> (i32, i32) {
    %c0_i32 = arith.constant 0 : i32
    %c0_i32_0 = arith.constant 0 : i32
    %c0_i32_1 = arith.constant 0 : i32
    return %c0_i32, %c0_i32_0 : i32, i32
  }
  func.func @transform_9(%arg0: i32) -> (i32, i32, i32) {
    %c0_i32 = arith.constant 0 : i32
    %c0_i32_0 = arith.constant 0 : i32
    %c0_i32_1 = arith.constant 0 : i32
    return %arg0, %c0_i32, %c0_i32_0 : i32, i32, i32
  }
}

</mosaic_0001>

<llo_original>
// kernel: hit_order_classifier.1
$region0: #{hit_order_classifier.1}
  #allocation0 [shape = 'u32[]', space=smem, size = 0x4, offset = 0x4, fixed_abs, tag = 'smem constant byte address 0x4 - core index']
  #allocation1 [shape = 'u32[144,128]{1,0:T(1,128)}', space=vmem, size = 0x12000, scoped, tag = 'internal scratch']
  #allocation2 [shape = 'f32[1,1]{1,0:T(1,128)S(1)}', space=vmem, size = 0x200, scoped, tag = 'scoped memory for hit_order_classifier.1']
  %s0 = inlined_call_operand.vmem [shape: f32[128,32], index: 0, kind: input, shape index: {}]
  %s1 = inlined_call_operand.vmem [shape: bf16[32,512], index: 1, kind: input, shape index: {}]
  %s2 = inlined_call_operand.vmem [shape: bf16[1,512], index: 2, kind: input, shape index: {}]
  %s3 = inlined_call_operand.vmem [shape: bf16[512,256], index: 3, kind: input, shape index: {}]
  %s4 = inlined_call_operand.vmem [shape: bf16[1,256], index: 4, kind: input, shape index: {}]
  %s5 = inlined_call_operand.vmem [shape: bf16[256,64], index: 5, kind: input, shape index: {}]
  %s6 = inlined_call_operand.vmem [shape: f32[1,64], index: 6, kind: input, shape index: {}]
  %s7 = inlined_call_operand.vmem [shape: f32[1,64], index: 7, kind: input, shape index: {}]
  %s8 = inlined_call_operand.<no memory space> [shape: f32[1,1], index: 8, kind: input, shape index: {}]
  %s9 = inlined_call_operand.vmem [shape: f32[1,1,128], index: 9, kind: output, shape index: {}]
  %s10 = sld [smem:[#allocation0]]
  $region46: #{hit_order_classifier.1} parent=0
    _
  %s12 = ssub.s32 1, %s10
  %s13 = scalar_select 0, %s12, %s10
  %v14 = vstv %s8
  %15 = vst [vmem:[#allocation2] sm:$0x1] %v14
  // Predicated region
  $region2: #{hit_order_classifier.1} parent=0 // pred_check
    _
  $region3: #{hit_order_classifier.1} parent=0 // pred_check_branch
    %17 = sbr.rel (0) target = $region5
  $region4: #{hit_order_classifier.1} parent=0 // pred_region
    _
  $region5: #{hit_order_classifier.1} parent=0 // pred_fallthru
    _
  // Predicated region
  $region6: #{hit_order_classifier.1} parent=0 // pred_check
    _
  $region7: #{hit_order_classifier.1} parent=0 // pred_check_branch
    %19 = sbr.rel (0) target = $region9
  $region8: #{hit_order_classifier.1} parent=0 // pred_region
    _
  $region9: #{hit_order_classifier.1} parent=0 // pred_fallthru
    _
  // Predicated region
  $region10: #{hit_order_classifier.1} parent=0 // pred_check
    _
  $region11: #{hit_order_classifier.1} parent=0 // pred_check_branch
    %21 = sbr.rel (0) target = $region13
  $region12: #{hit_order_classifier.1} parent=0 // pred_region
    _
  $region13: #{hit_order_classifier.1} parent=0 // pred_fallthru
    _
  // Predicated region
  $region14: #{hit_order_classifier.1} parent=0 // pred_check
    _
  $region15: #{hit_order_classifier.1} parent=0 // pred_check_branch
    %23 = sbr.rel (0) target = $region17
  $region16: #{hit_order_classifier.1} parent=0 // pred_region
    _
  $region17: #{hit_order_classifier.1} parent=0 // pred_fallthru
    _
  // Predicated region
  $region18: #{hit_order_classifier.1} parent=0 // pred_check
    _
  $region19: #{hit_order_classifier.1} parent=0 // pred_check_branch
    %25 = sbr.rel (0) target = $region21
  $region20: #{hit_order_classifier.1} parent=0 // pred_region
    _
  $region21: #{hit_order_classifier.1} parent=0 // pred_fallthru
    _
  // Predicated region
  $region22: #{hit_order_classifier.1} parent=0 // pred_check
    _
  $region23: #{hit_order_classifier.1} parent=0 // pred_check_branch
    %27 = sbr.rel (0) target = $region25
  $region24: #{hit_order_classifier.1} parent=0 // pred_region
    _
  $region25: #{hit_order_classifier.1} parent=0 // pred_fallthru
    _
  // Predicated region
  $region26: #{hit_order_classifier.1} parent=0 // pred_check
    _
  $region27: #{hit_order_classifier.1} parent=0 // pred_check_branch
    %29 = sbr.rel (0) target = $region29
  $region28: #{hit_order_classifier.1} parent=0 // pred_region
    _
  $region29: #{hit_order_classifier.1} parent=0 // pred_fallthru
    _
  // Predicated region
  $region30: #{hit_order_classifier.1} parent=0 // pred_check
    _
  $region31: #{hit_order_classifier.1} parent=0 // pred_check_branch
    %31 = sbr.rel (0) target = $region33
  $region32: #{hit_order_classifier.1} parent=0 // pred_region
    _
  $region33: #{hit_order_classifier.1} parent=0 // pred_fallthru
    _
  // Predicated region
  $region34: #{hit_order_classifier.1} parent=0 // pred_check
    _
  $region35: #{hit_order_classifier.1} parent=0 // pred_check_branch
    %33 = sbr.rel (0) target = $region37
  $region36: #{hit_order_classifier.1} parent=0 // pred_region
    _
  $region37: #{hit_order_classifier.1} parent=0 // pred_fallthru
    _
  %v35 = vld [vmem:[%s0] sm:$0xff]
  %v36 = vld [vmem:[%s0 + $0x8] sm:$0xff]
  %v37 = vld [vmem:[%s0 + $0x10] sm:$0xff]
  %v38 = vld [vmem:[%s0 + $0x18] sm:$0xff]
  %v39 = vld [vmem:[%s0 + $0x20] sm:$0xff]
  %v40 = vld [vmem:[%s0 + $0x28] sm:$0xff]
  %v41 = vld [vmem:[%s0 + $0x30] sm:$0xff]
  %v42 = vld [vmem:[%s0 + $0x38] sm:$0xff]
  %v43 = vld [vmem:[%s0 + $0x40] sm:$0xff]
  %v44 = vld [vmem:[%s0 + $0x48] sm:$0xff]
  %v45 = vld [vmem:[%s0 + $0x50] sm:$0xff]
  %v46 = vld [vmem:[%s0 + $0x58] sm:$0xff]
  %v47 = vld [vmem:[%s0 + $0x60] sm:$0xff]
  %v48 = vld [vmem:[%s0 + $0x68] sm:$0xff]
  %v49 = vld [vmem:[%s0 + $0x70] sm:$0xff]
  %v50 = vld [vmem:[%s0 + $0x78] sm:$0xff]
  %v51 = vpack.c.bf16 %v36, %v35
  %v52 = vpack.c.bf16 %v38, %v37
  %v53 = vpack.c.bf16 %v40, %v39
  %v54 = vpack.c.bf16 %v42, %v41
  %v55 = vpack.c.bf16 %v44, %v43
  %v56 = vpack.c.bf16 %v46, %v45
  %v57 = vpack.c.bf16 %v48, %v47
  %v58 = vpack.c.bf16 %v50, %v49
  %v59 = vld [vmem:[%s1] sm:$0xff]
  %v60 = vld [vmem:[%s1 + $0x8] sm:$0xff]
  %v61 = vld [vmem:[%s1 + $0x10] sm:$0xff]
  %v62 = vld [vmem:[%s1 + $0x18] sm:$0xff]
  %v63 = vld [vmem:[%s1 + $0x20] sm:$0xff]
  %v64 = vld [vmem:[%s1 + $0x28] sm:$0xff]
  %v65 = vld [vmem:[%s1 + $0x30] sm:$0xff]
  %v66 = vld [vmem:[%s1 + $0x38] sm:$0xff]
  %v75 = vunpack.c.l.b16 %v59
  %v76 = vunpack.c.h.b16 %v59
  %v77 = vunpack.c.l.b16 %v60
  %v78 = vunpack.c.h.b16 %v60
  %v79 = vunpack.c.l.b16 %v61
  %v80 = vunpack.c.h.b16 %v61
  %v81 = vunpack.c.l.b16 %v62
  %v82 = vunpack.c.h.b16 %v62
  %v83 = vunpack.c.l.b16 %v63
  %v84 = vunpack.c.h.b16 %v63
  %v85 = vunpack.c.l.b16 %v64
  %v86 = vunpack.c.h.b16 %v64
  %v87 = vunpack.c.l.b16 %v65
  %v88 = vunpack.c.h.b16 %v65
  %v89 = vunpack.c.l.b16 %v66
  %v90 = vunpack.c.h.b16 %v66
  %v91 = vpack.c.b16 %v79, %v75
  %v92 = vpack.c.b16 %v80, %v76
  %v93 = vpack.c.b16 %v81, %v77
  %v94 = vpack.c.b16 %v82, %v78
  %v95 = vpack.c.b16 %v87, %v83
  %v96 = vpack.c.b16 %v88, %v84
  %v97 = vpack.c.b16 %v89, %v85
  %v98 = vpack.c.b16 %v90, %v86
  %vm107 = vcmask 261120
  %v109 = vsel %vm107, %v51, 0
  %v112 = vsel %vm107, %v52, 0
  %v115 = vsel %vm107, %v53, 0
  %v118 = vsel %vm107, %v54, 0
  %v121 = vsel %vm107, %v55, 0
  %v124 = vsel %vm107, %v56, 0
  %v127 = vsel %vm107, %v57, 0
  %v130 = vsel %vm107, %v58, 0
  %132 = vmatprep.subr.bf16.mxu0 %v92
  %133 = vmatpush1.bf16.msra.mxu0 %v91
  %134 = vmatprep.subr.bf16.mxu0 %v96
  %135 = vmatpush1.bf16.msra.mxu0 %v95
  %136 = vmatprep.subr.bf16.mxu0 0
  %137 = vmatpush1.bf16.msra.mxu0 0
  %138 = vmatprep.subr.bf16.mxu0 0
  %139 = vmatpush1.bf16.msra.mxu0 0
  %140 = vmatprep.subr.bf16.mxu0 0
  %141 = vmatpush1.bf16.msra.mxu0 0
  %142 = vmatprep.subr.bf16.mxu0 0
  %143 = vmatpush1.bf16.msra.mxu0 0
  %144 = vmatprep.subr.bf16.mxu0 0
  %145 = vmatpush1.bf16.msra.mxu0 0
  %146 = vmatprep.subr.bf16.mxu0 0
  %147 = vmatpush1.bf16.msra.mxu0 0
  %148 = vmatprep.subr.bf16.mxu0 0
  %149 = vmatpush1.bf16.msra.mxu0 0
  %150 = vmatprep.subr.bf16.mxu0 0
  %151 = vmatpush1.bf16.msra.mxu0 0
  %152 = vmatprep.subr.bf16.mxu0 0
  %153 = vmatpush1.bf16.msra.mxu0 0
  %154 = vmatprep.subr.bf16.mxu0 0
  %155 = vmatpush1.bf16.msra.mxu0 0
  %156 = vmatprep.subr.bf16.mxu0 0
  %157 = vmatpush1.bf16.msra.mxu0 0
  %158 = vmatprep.subr.bf16.mxu0 0
  %159 = vmatpush1.bf16.msra.mxu0 0
  %160 = vmatprep.subr.bf16.mxu0 0
  %161 = vmatpush1.bf16.msra.mxu0 0
  %162 = vmatprep.subr.bf16.mxu0 0
  %163 = vmatpush1.bf16.msra.mxu0 0
  %164 = vmatprep.mubr.bf16.mxu0 0
  %165 = vmatmul.mubr.bf16.gmra.mrb[0].mxu0 %v109
  %v166 = vpop.f32.mrb[0].mxu0
  %v167 = vadd.f32 0.0, %v166
  %v168 = vpop.f32.mrb[0].mxu0
  %v169 = vadd.f32 0.0, %v168
  %v170 = vpop.f32.mrb[0].mxu0
  %v171 = vadd.f32 0.0, %v170
  %v172 = vpop.f32.mrb[0].mxu0
  %v173 = vadd.f32 0.0, %v172
  %174 = vmatprep.mubr.bf16.mxu0 0
  %175 = vmatmul.mubr.bf16.gmra.mrb[0].mxu0 %v112
  %v176 = vpop.f32.mrb[0].mxu0
  %v177 = vadd.f32 0.0, %v176
  %v178 = vpop.f32.mrb[0].mxu0
  %v179 = vadd.f32 0.0, %v178
  %v180 = vpop.f32.mrb[0].mxu0
  %v181 = vadd.f32 0.0, %v180
  %v182 = vpop.f32.mrb[0].mxu0
  %v183 = vadd.f32 0.0, %v182
  %184 = vmatprep.mubr.bf16.mxu0 0
  %185 = vmatmul.mubr.bf16.gmra.mrb[0].mxu0 %v115
  %v186 = vpop.f32.mrb[0].mxu0
  %v187 = vadd.f32 0.0, %v186
  %v188 = vpop.f32.mrb[0].mxu0
  %v189 = vadd.f32 0.0, %v188
  %v190 = vpop.f32.mrb[0].mxu0
  %v191 = vadd.f32 0.0, %v190
  %v192 = vpop.f32.mrb[0].mxu0
  %v193 = vadd.f32 0.0, %v192
  %194 = vmatprep.mubr.bf16.mxu0 0
  %195 = vmatmul.mubr.bf16.gmra.mrb[0].mxu0 %v118
  %v196 = vpop.f32.mrb[0].mxu0
  %v197 = vadd.f32 0.0, %v196
  %v198 = vpop.f32.mrb[0].mxu0
  %v199 = vadd.f32 0.0, %v198
  %v200 = vpop.f32.mrb[0].mxu0
  %v201 = vadd.f32 0.0, %v200
  %v202 = vpop.f32.mrb[0].mxu0
  %v203 = vadd.f32 0.0, %v202
  %204 = vmatprep.mubr.bf16.mxu0 0
  %205 = vmatmul.mubr.bf16.gmra.mrb[0].mxu0 %v121
  %v206 = vpop.f32.mrb[0].mxu0
  %v207 = vadd.f32 0.0, %v206
  %v208 = vpop.f32.mrb[0].mxu0
  %v209 = vadd.f32 0.0, %v208
  %v210 = vpop.f32.mrb[0].mxu0
  %v211 = vadd.f32 0.0, %v210
  %v212 = vpop.f32.mrb[0].mxu0
  %v213 = vadd.f32 0.0, %v212
  %214 = vmatprep.mubr.bf16.mxu0 0
  %215 = vmatmul.mubr.bf16.gmra.mrb[0].mxu0 %v124
  %v216 = vpop.f32.mrb[0].mxu0
  %v217 = vadd.f32 0.0, %v216
  %v218 = vpop.f32.mrb[0].mxu0
  %v219 = vadd.f32 0.0, %v218
  %v220 = vpop.f32.mrb[0].mxu0
  %v221 = vadd.f32 0.0, %v220
  %v222 = vpop.f32.mrb[0].mxu0
  %v223 = vadd.f32 0.0, %v222
  %224 = vmatprep.mubr.bf16.mxu0 0
  %225 = vmatmul.mubr.bf16.gmra.mrb[0].mxu0 %v127
  %v226 = vpop.f32.mrb[0].mxu0
  %v227 = vadd.f32 0.0, %v226
  %v228 = vpop.f32.mrb[0].mxu0
  %v229 = vadd.f32 0.0, %v228
  %v230 = vpop.f32.mrb[0].mxu0
  %v231 = vadd.f32 0.0, %v230
  %v232 = vpop.f32.mrb[0].mxu0
  %v233 = vadd.f32 0.0, %v232
  %234 = vmatprep.mubr.bf16.mxu0 0
  %235 = vmatmul.mubr.bf16.gmra.mrb[0].mxu0 %v130
  %v236 = vpop.f32.mrb[0].mxu0
  %v237 = vadd.f32 0.0, %v236
  %v238 = vpop.f32.mrb[0].mxu0
  %v239 = vadd.f32 0.0, %v238
  %v240 = vpop.f32.mrb[0].mxu0
  %v241 = vadd.f32 0.0, %v240
  %v242 = vpop.f32.mrb[0].mxu0
  %v243 = vadd.f32 0.0, %v242
  %244 = vdwg.mxu0
  %245 = vmatprep.subr.bf16.mxu0 %v94
  %246 = vmatpush1.bf16.msra.mxu0 %v93
  %247 = vmatprep.subr.bf16.mxu0 %v98
  %248 = vmatpush1.bf16.msra.mxu0 %v97
  %249 = vmatprep.subr.bf16.mxu0 0
  %250 = vmatpush1.bf16.msra.mxu0 0
  %251 = vmatprep.subr.bf16.mxu0 0
  %252 = vmatpush1.bf16.msra.mxu0 0
  %253 = vmatprep.subr.bf16.mxu0 0
  %254 = vmatpush1.bf16.msra.mxu0 0
  %255 = vmatprep.subr.bf16.mxu0 0
  %256 = vmatpush1.bf16.msra.mxu0 0
  %257 = vmatprep.subr.bf16.mxu0 0
  %258 = vmatpush1.bf16.msra.mxu0 0
  %259 = vmatprep.subr.bf16.mxu0 0
  %260 = vmatpush1.bf16.msra.mxu0 0
  %261 = vmatprep.subr.bf16.mxu0 0
  %262 = vmatpush1.bf16.msra.mxu0 0
  %263 = vmatprep.subr.bf16.mxu0 0
  %264 = vmatpush1.bf16.msra.mxu0 0
  %265 = vmatprep.subr.bf16.mxu0 0
  %266 = vmatpush1.bf16.msra.mxu0 0
  %267 = vmatprep.subr.bf16.mxu0 0
  %268 = vmatpush1.bf16.msra.mxu0 0
  %269 = vmatprep.subr.bf16.mxu0 0
  %270 = vmatpush1.bf16.msra.mxu0 0
  %271 = vmatprep.subr.bf16.mxu0 0
  %272 = vmatpush1.bf16.msra.mxu0 0
  %273 = vmatprep.subr.bf16.mxu0 0
  %274 = vmatpush1.bf16.msra.mxu0 0
  %275 = vmatprep.subr.bf16.mxu0 0
  %276 = vmatpush1.bf16.msra.mxu0 0
  %277 = vmatprep.mubr.bf16.mxu0 0
  %278 = vmatmul.mubr.bf16.gmra.mrb[0].mxu0 %v109
  %v279 = vpop.f32.mrb[0].mxu0
  %v280 = vadd.f32 0.0, %v279
  %v281 = vpop.f32.mrb[0].mxu0
  %v282 = vadd.f32 0.0, %v281
  %v283 = vpop.f32.mrb[0].mxu0
  %v284 = vadd.f32 0.0, %v283
  %v285 = vpop.f32.mrb[0].mxu0
  %v286 = vadd.f32 0.0, %v285
  %287 = vmatprep.mubr.bf16.mxu0 0
  %288 = vmatmul.mubr.bf16.gmra.mrb[0].mxu0 %v112
  %v289 = vpop.f32.mrb[0].mxu0
  %v290 = vadd.f32 0.0, %v289
  %v291 = vpop.f32.mrb[0].mxu0
  %v292 = vadd.f32 0.0, %v291
  %v293 = vpop.f32.mrb[0].mxu0
  %v294 = vadd.f32 0.0, %v293
  %v295 = vpop.f32.mrb[0].mxu0
  %v296 = vadd.f32 0.0, %v295
  %297 = vmatprep.mubr.bf16.mxu0 0
  %298 = vmatmul.mubr.bf16.gmra.mrb[0].mxu0 %v115
  %v299 = vpop.f32.mrb[0].mxu0
  %v300 = vadd.f32 0.0, %v299
  %v301 = vpop.f32.mrb[0].mxu0
  %v302 = vadd.f32 0.0, %v301
  %v303 = vpop.f32.mrb[0].mxu0
  %v304 = vadd.f32 0.0, %v303
  %v305 = vpop.f32.mrb[0].mxu0
  %v306 = vadd.f32 0.0, %v305
  %307 = vmatprep.mubr.bf16.mxu0 0
  %308 = vmatmul.mubr.bf16.gmra.mrb[0].mxu0 %v118
  %v309 = vpop.f32.mrb[0].mxu0
  %v310 = vadd.f32 0.0, %v309
  %v311 = vpop.f32.mrb[0].mxu0
  %v312 = vadd.f32 0.0, %v311
  %v313 = vpop.f32.mrb[0].mxu0
  %v314 = vadd.f32 0.0, %v313
  %v315 = vpop.f32.mrb[0].mxu0
  %v316 = vadd.f32 0.0, %v315
  %317 = vmatprep.mubr.bf16.mxu0 0
  %318 = vmatmul.mubr.bf16.gmra.mrb[0].mxu0 %v121
  %v319 = vpop.f32.mrb[0].mxu0
  %v320 = vadd.f32 0.0, %v319
  %v321 = vpop.f32.mrb[0].mxu0
  %v322 = vadd.f32 0.0, %v321
  %v323 = vpop.f32.mrb[0].mxu0
  %v324 = vadd.f32 0.0, %v323
  %v325 = vpop.f32.mrb[0].mxu0
  %v326 = vadd.f32 0.0, %v325
  %327 = vmatprep.mubr.bf16.mxu0 0
  %328 = vmatmul.mubr.bf16.gmra.mrb[0].mxu0 %v124
  %v329 = vpop.f32.mrb[0].mxu0
  %v330 = vadd.f32 0.0, %v329
  %v331 = vpop.f32.mrb[0].mxu0
  %v332 = vadd.f32 0.0, %v331
  %v333 = vpop.f32.mrb[0].mxu0
  %v334 = vadd.f32 0.0, %v333
  %v335 = vpop.f32.mrb[0].mxu0
  %v336 = vadd.f32 0.0, %v335
  %337 = vmatprep.mubr.bf16.mxu0 0
  %338 = vmatmul.mubr.bf16.gmra.mrb[0].mxu0 %v127
  %v339 = vpop.f32.mrb[0].mxu0
  %v340 = vadd.f32 0.0, %v339
  %v341 = vpop.f32.mrb[0].mxu0
  %v342 = vadd.f32 0.0, %v341
  %v343 = vpop.f32.mrb[0].mxu0
  %v344 = vadd.f32 0.0, %v343
  %v345 = vpop.f32.mrb[0].mxu0
  %v346 = vadd.f32 0.0, %v345
  %347 = vmatprep.mubr.bf16.mxu0 0
  %348 = vmatmul.mubr.bf16.gmra.mrb[0].mxu0 %v130
  %v349 = vpop.f32.mrb[0].mxu0
  %v350 = vadd.f32 0.0, %v349
  %v351 = vpop.f32.mrb[0].mxu0
  %v352 = vadd.f32 0.0, %v351
  %v353 = vpop.f32.mrb[0].mxu0
  %v354 = vadd.f32 0.0, %v353
  %v355 = vpop.f32.mrb[0].mxu0
  %v356 = vadd.f32 0.0, %v355
  %357 = vdwg.mxu0
  %v358 = vpack.c.bf16 %v171, %v167
  %v359 = vpack.c.bf16 %v173, %v169
  %v360 = vpack.c.bf16 %v284, %v280
  %v361 = vpack.c.bf16 %v286, %v282
  %v362 = vpack.c.bf16 %v181, %v177
  %v363 = vpack.c.bf16 %v183, %v179
  %v364 = vpack.c.bf16 %v294, %v290
  %v365 = vpack.c.bf16 %v296, %v292
  %v366 = vpack.c.bf16 %v191, %v187
  %v367 = vpack.c.bf16 %v193, %v189
  %v368 = vpack.c.bf16 %v304, %v300
  %v369 = vpack.c.bf16 %v306, %v302
  %v370 = vpack.c.bf16 %v201, %v197
  %v371 = vpack.c.bf16 %v203, %v199
  %v372 = vpack.c.bf16 %v314, %v310
  %v373 = vpack.c.bf16 %v316, %v312
  %v374 = vpack.c.bf16 %v211, %v207
  %v375 = vpack.c.bf16 %v213, %v209
  %v376 = vpack.c.bf16 %v324, %v320
  %v377 = vpack.c.bf16 %v326, %v322
  %v378 = vpack.c.bf16 %v221, %v217
  %v379 = vpack.c.bf16 %v223, %v219
  %v380 = vpack.c.bf16 %v334, %v330
  %v381 = vpack.c.bf16 %v336, %v332
  %v382 = vpack.c.bf16 %v231, %v227
  %v383 = vpack.c.bf16 %v233, %v229
  %v384 = vpack.c.bf16 %v344, %v340
  %v385 = vpack.c.bf16 %v346, %v342
  %v386 = vpack.c.bf16 %v241, %v237
  %v387 = vpack.c.bf16 %v243, %v239
  %v388 = vpack.c.bf16 %v354, %v350
  %v389 = vpack.c.bf16 %v356, %v352
  %v390 = vld [vmem:[%s2] sm:$0xf]
  %v393 = vunpack.c.l.s4 1966171168
  %v394 = vunpack.c.0.s8 %v393
  %v395 = vlaneseq
  %v396 = vshrl.u32 %v395, 7
  %v397 = vsub.s32 %v394, %v396
  %v398 = vrot.slane %v390, %v397
  %v399 = vcombine.high %v398, %v398
  %v401 = vunpack.c.l.s4 1966171168
  %v402 = vunpack.c.0.s8 %v401
  %v403 = vlaneseq
  %v404 = vshrl.u32 %v403, 7
  %v405 = vsub.s32 %v402, %v404
  %v406 = vrot.slane %v398, %v405
  %v408 = vunpack.c.l.s4 1966171168
  %v409 = vunpack.c.0.s8 %v408
  %v410 = vlaneseq
  %v411 = vshrl.u32 %v410, 7
  %v412 = vsub.s32 %v409, %v411
  %v413 = vrot.slane %v399, %v412
  %v414 = vcombine.high %v406, %v406
  %v415 = vcombine.high %v413, %v413
  %v417 = vpack.i.b16 %v406, %v406
  %v419 = vlaneseq
  %v420 = vshrl.u32 %v419, 7
  %v421 = vsub.s32 0, %v420
  %v422 = vrot.slane %v417, %v421
  %v424 = vpack.i.b16 %v413, %v413
  %v426 = vlaneseq
  %v427 = vshrl.u32 %v426, 7
  %v428 = vsub.s32 0, %v427
  %v429 = vrot.slane %v424, %v428
  %v431 = vpack.i.b16 %v414, %v414
  %v433 = vlaneseq
  %v434 = vshrl.u32 %v433, 7
  %v435 = vsub.s32 0, %v434
  %v436 = vrot.slane %v431, %v435
  %v438 = vpack.i.b16 %v415, %v415
  %v440 = vlaneseq
  %v441 = vshrl.u32 %v440, 7
  %v442 = vsub.s32 0, %v441
  %v443 = vrot.slane %v438, %v442
  %v444 = vadd.bf16 %v358, %v422
  %v445 = vadd.bf16 %v359, %v429
  %v446 = vadd.bf16 %v360, %v436
  %v447 = vadd.bf16 %v361, %v443
  %v448 = vadd.bf16 %v362, %v422
  %v449 = vadd.bf16 %v363, %v429
  %v450 = vadd.bf16 %v364, %v436
  %v451 = vadd.bf16 %v365, %v443
  %v452 = vadd.bf16 %v366, %v422
  %v453 = vadd.bf16 %v367, %v429
  %v454 = vadd.bf16 %v368, %v436
  %v455 = vadd.bf16 %v369, %v443
  %v456 = vadd.bf16 %v370, %v422
  %v457 = vadd.bf16 %v371, %v429
  %v458 = vadd.bf16 %v372, %v436
  %v459 = vadd.bf16 %v373, %v443
  %v460 = vadd.bf16 %v374, %v422
  %v461 = vadd.bf16 %v375, %v429
  %v462 = vadd.bf16 %v376, %v436
  %v463 = vadd.bf16 %v377, %v443
  %v464 = vadd.bf16 %v378, %v422
  %v465 = vadd.bf16 %v379, %v429
  %v466 = vadd.bf16 %v380, %v436
  %v467 = vadd.bf16 %v381, %v443
  %v468 = vadd.bf16 %v382, %v422
  %v469 = vadd.bf16 %v383, %v429
  %v470 = vadd.bf16 %v384, %v436
  %v471 = vadd.bf16 %v385, %v443
  %v472 = vadd.bf16 %v386, %v422
  %v473 = vadd.bf16 %v387, %v429
  %v474 = vadd.bf16 %v388, %v436
  %v475 = vadd.bf16 %v389, %v443
  %v476 = vmax.bf16 %v444, 0
  %v477 = vmax.bf16 %v445, 0
  %v478 = vmax.bf16 %v446, 0
  %v479 = vmax.bf16 %v447, 0
  %v480 = vmax.bf16 %v448, 0
  %v481 = vmax.bf16 %v449, 0
  %v482 = vmax.bf16 %v450, 0
  %v483 = vmax.bf16 %v451, 0
  %v484 = vmax.bf16 %v452, 0
  %v485 = vmax.bf16 %v453, 0
  %v486 = vmax.bf16 %v454, 0
  %v487 = vmax.bf16 %v455, 0
  %v488 = vmax.bf16 %v456, 0
  %v489 = vmax.bf16 %v457, 0
  %v490 = vmax.bf16 %v458, 0
  %v491 = vmax.bf16 %v459, 0
  %v492 = vmax.bf16 %v460, 0
  %v493 = vmax.bf16 %v461, 0
  %v494 = vmax.bf16 %v462, 0
  %v495 = vmax.bf16 %v463, 0
  %v496 = vmax.bf16 %v464, 0
  %v497 = vmax.bf16 %v465, 0
  %v498 = vmax.bf16 %v466, 0
  %v499 = vmax.bf16 %v467, 0
  %v500 = vmax.bf16 %v468, 0
  %v501 = vmax.bf16 %v469, 0
  %v502 = vmax.bf16 %v470, 0
  %v503 = vmax.bf16 %v471, 0
  %v504 = vmax.bf16 %v472, 0
  %v505 = vmax.bf16 %v473, 0
  %v506 = vmax.bf16 %v474, 0
  %v507 = vmax.bf16 %v475, 0
  %v508 = vld [vmem:[%s3] sm:$0xff]
  %v509 = vld [vmem:[%s3 + $0x8] sm:$0xff]
  %v510 = vld [vmem:[%s3 + $0x10] sm:$0xff]
  %v511 = vld [vmem:[%s3 + $0x18] sm:$0xff]
  %v512 = vld [vmem:[%s3 + $0x20] sm:$0xff]
  %v513 = vld [vmem:[%s3 + $0x28] sm:$0xff]
  %v514 = vld [vmem:[%s3 + $0x30] sm:$0xff]
  %v515 = vld [vmem:[%s3 + $0x38] sm:$0xff]
  %v516 = vld [vmem:[%s3 + $0x40] sm:$0xff]
  %v517 = vld [vmem:[%s3 + $0x48] sm:$0xff]
  %v518 = vld [vmem:[%s3 + $0x50] sm:$0xff]
  %v519 = vld [vmem:[%s3 + $0x58] sm:$0xff]
  %v520 = vld [vmem:[%s3 + $0x60] sm:$0xff]
  %v521 = vld [vmem:[%s3 + $0x68] sm:$0xff]
  %v522 = vld [vmem:[%s3 + $0x70] sm:$0xff]
  %v523 = vld [vmem:[%s3 + $0x78] sm:$0xff]
  %v524 = vld [vmem:[%s3 + $0x80] sm:$0xff]
  %v525 = vld [vmem:[%s3 + $0x88] sm:$0xff]
  %v526 = vld [vmem:[%s3 + $0x90] sm:$0xff]
  %v527 = vld [vmem:[%s3 + $0x98] sm:$0xff]
  %v528 = vld [vmem:[%s3 + $0xa0] sm:$0xff]
  %v529 = vld [vmem:[%s3 + $0xa8] sm:$0xff]
  %v530 = vld [vmem:[%s3 + $0xb0] sm:$0xff]
  %v531 = vld [vmem:[%s3 + $0xb8] sm:$0xff]
  %v532 = vld [vmem:[%s3 + $0xc0] sm:$0xff]
  %v533 = vld [vmem:[%s3 + $0xc8] sm:$0xff]
  %v534 = vld [vmem:[%s3 + $0xd0] sm:$0xff]
  %v535 = vld [vmem:[%s3 + $0xd8] sm:$0xff]
  %v536 = vld [vmem:[%s3 + $0xe0] sm:$0xff]
  %v537 = vld [vmem:[%s3 + $0xe8] sm:$0xff]
  %v538 = vld [vmem:[%s3 + $0xf0] sm:$0xff]
  %v539 = vld [vmem:[%s3 + $0xf8] sm:$0xff]
  %v540 = vld [vmem:[%s3 + $0x100] sm:$0xff]
  %v541 = vld [vmem:[%s3 + $0x108] sm:$0xff]
  %v542 = vld [vmem:[%s3 + $0x110] sm:$0xff]
  %v543 = vld [vmem:[%s3 + $0x118] sm:$0xff]
  %v544 = vld [vmem:[%s3 + $0x120] sm:$0xff]
  %v545 = vld [vmem:[%s3 + $0x128] sm:$0xff]
  %v546 = vld [vmem:[%s3 + $0x130] sm:$0xff]
  %v547 = vld [vmem:[%s3 + $0x138] sm:$0xff]
  %v548 = vld [vmem:[%s3 + $0x140] sm:$0xff]
  %v549 = vld [vmem:[%s3 + $0x148] sm:$0xff]
  %v550 = vld [vmem:[%s3 + $0x150] sm:$0xff]
  %v551 = vld [vmem:[%s3 + $0x158] sm:$0xff]
  %v552 = vld [vmem:[%s3 + $0x160] sm:$0xff]
  %v553 = vld [vmem:[%s3 + $0x168] sm:$0xff]
  %v554 = vld [vmem:[%s3 + $0x170] sm:$0xff]
  %v555 = vld [vmem:[%s3 + $0x178] sm:$0xff]
  %v556 = vld [vmem:[%s3 + $0x180] sm:$0xff]
  %v557 = vld [vmem:[%s3 + $0x188] sm:$0xff]
  %v558 = vld [vmem:[%s3 + $0x190] sm:$0xff]
  %v559 = vld [vmem:[%s3 + $0x198] sm:$0xff]
  %v560 = vld [vmem:[%s3 + $0x1a0] sm:$0xff]
  %v561 = vld [vmem:[%s3 + $0x1a8] sm:$0xff]
  %v562 = vld [vmem:[%s3 + $0x1b0] sm:$0xff]
  %v563 = vld [vmem:[%s3 + $0x1b8] sm:$0xff]
  %v564 = vld [vmem:[%s3 + $0x1c0] sm:$0xff]
  %v565 = vld [vmem:[%s3 + $0x1c8] sm:$0xff]
  %v566 = vld [vmem:[%s3 + $0x1d0] sm:$0xff]
  %v567 = vld [vmem:[%s3 + $0x1d8] sm:$0xff]
  %v568 = vld [vmem:[%s3 + $0x1e0] sm:$0xff]
  %v569 = vld [vmem:[%s3 + $0x1e8] sm:$0xff]
  %v570 = vld [vmem:[%s3 + $0x1f0] sm:$0xff]
  %v571 = vld [vmem:[%s3 + $0x1f8] sm:$0xff]
  %v636 = vunpack.c.l.b16 %v508
  %v637 = vunpack.c.h.b16 %v508
  %v638 = vunpack.c.l.b16 %v509
  %v639 = vunpack.c.h.b16 %v509
  %v640 = vunpack.c.l.b16 %v510
  %v641 = vunpack.c.h.b16 %v510
  %v642 = vunpack.c.l.b16 %v511
  %v643 = vunpack.c.h.b16 %v511
  %v644 = vunpack.c.l.b16 %v512
  %v645 = vunpack.c.h.b16 %v512
  %v646 = vunpack.c.l.b16 %v513
  %v647 = vunpack.c.h.b16 %v513
  %v648 = vunpack.c.l.b16 %v514
  %v649 = vunpack.c.h.b16 %v514
  %v650 = vunpack.c.l.b16 %v515
  %v651 = vunpack.c.h.b16 %v515
  %v652 = vunpack.c.l.b16 %v516
  %v653 = vunpack.c.h.b16 %v516
  %v654 = vunpack.c.l.b16 %v517
  %v655 = vunpack.c.h.b16 %v517
  %v656 = vunpack.c.l.b16 %v518
  %v657 = vunpack.c.h.b16 %v518
  %v658 = vunpack.c.l.b16 %v519
  %v659 = vunpack.c.h.b16 %v519
  %v660 = vunpack.c.l.b16 %v520
  %v661 = vunpack.c.h.b16 %v520
  %v662 = vunpack.c.l.b16 %v521
  %v663 = vunpack.c.h.b16 %v521
  %v664 = vunpack.c.l.b16 %v522
  %v665 = vunpack.c.h.b16 %v522
  %v666 = vunpack.c.l.b16 %v523
  %v667 = vunpack.c.h.b16 %v523
  %v668 = vunpack.c.l.b16 %v524
  %v669 = vunpack.c.h.b16 %v524
  %v670 = vunpack.c.l.b16 %v525
  %v671 = vunpack.c.h.b16 %v525
  %v672 = vunpack.c.l.b16 %v526
  %v673 = vunpack.c.h.b16 %v526
  %v674 = vunpack.c.l.b16 %v527
  %v675 = vunpack.c.h.b16 %v527
  %v676 = vunpack.c.l.b16 %v528
  %v677 = vunpack.c.h.b16 %v528
  %v678 = vunpack.c.l.b16 %v529
  %v679 = vunpack.c.h.b16 %v529
  %v680 = vunpack.c.l.b16 %v530
  %v681 = vunpack.c.h.b16 %v530
  %v682 = vunpack.c.l.b16 %v531
  %v683 = vunpack.c.h.b16 %v531
  %v684 = vunpack.c.l.b16 %v532
  %v685 = vunpack.c.h.b16 %v532
  %v686 = vunpack.c.l.b16 %v533
  %v687 = vunpack.c.h.b16 %v533
  %v688 = vunpack.c.l.b16 %v534
  %v689 = vunpack.c.h.b16 %v534
  %v690 = vunpack.c.l.b16 %v535
  %v691 = vunpack.c.h.b16 %v535
  %v692 = vunpack.c.l.b16 %v536
  %v693 = vunpack.c.h.b16 %v536
  %v694 = vunpack.c.l.b16 %v537
  %v695 = vunpack.c.h.b16 %v537
  %v696 = vunpack.c.l.b16 %v538
  %v697 = vunpack.c.h.b16 %v538
  %v698 = vunpack.c.l.b16 %v539
  %v699 = vunpack.c.h.b16 %v539
  %v700 = vunpack.c.l.b16 %v540
  %v701 = vunpack.c.h.b16 %v540
  %v702 = vunpack.c.l.b16 %v541
  %v703 = vunpack.c.h.b16 %v541
  %v704 = vunpack.c.l.b16 %v542
  %v705 = vunpack.c.h.b16 %v542
  %v706 = vunpack.c.l.b16 %v543
  %v707 = vunpack.c.h.b16 %v543
  %v708 = vunpack.c.l.b16 %v544
  %v709 = vunpack.c.h.b16 %v544
  %v710 = vunpack.c.l.b16 %v545
  %v711 = vunpack.c.h.b16 %v545
  %v712 = vunpack.c.l.b16 %v546
  %v713 = vunpack.c.h.b16 %v546
  %v714 = vunpack.c.l.b16 %v547
  %v715 = vunpack.c.h.b16 %v547
  %v716 = vunpack.c.l.b16 %v548
  %v717 = vunpack.c.h.b16 %v548
  %v718 = vunpack.c.l.b16 %v549
  %v719 = vunpack.c.h.b16 %v549
  %v720 = vunpack.c.l.b16 %v550
  %v721 = vunpack.c.h.b16 %v550
  %v722 = vunpack.c.l.b16 %v551
  %v723 = vunpack.c.h.b16 %v551
  %v724 = vunpack.c.l.b16 %v552
  %v725 = vunpack.c.h.b16 %v552
  %v726 = vunpack.c.l.b16 %v553
  %v727 = vunpack.c.h.b16 %v553
  %v728 = vunpack.c.l.b16 %v554
  %v729 = vunpack.c.h.b16 %v554
  %v730 = vunpack.c.l.b16 %v555
  %v731 = vunpack.c.h.b16 %v555
  %v732 = vunpack.c.l.b16 %v556
  %v733 = vunpack.c.h.b16 %v556
  %v734 = vunpack.c.l.b16 %v557
  %v735 = vunpack.c.h.b16 %v557
  %v736 = vunpack.c.l.b16 %v558
  %v737 = vunpack.c.h.b16 %v558
  %v738 = vunpack.c.l.b16 %v559
  %v739 = vunpack.c.h.b16 %v559
  %v740 = vunpack.c.l.b16 %v560
  %v741 = vunpack.c.h.b16 %v560
  %v742 = vunpack.c.l.b16 %v561
  %v743 = vunpack.c.h.b16 %v561
  %v744 = vunpack.c.l.b16 %v562
  %v745 = vunpack.c.h.b16 %v562
  %v746 = vunpack.c.l.b16 %v563
  %v747 = vunpack.c.h.b16 %v563
  %v748 = vunpack.c.l.b16 %v564
  %v749 = vunpack.c.h.b16 %v564
  %v750 = vunpack.c.l.b16 %v565
  %v751 = vunpack.c.h.b16 %v565
  %v752 = vunpack.c.l.b16 %v566
  %v753 = vunpack.c.h.b16 %v566
  %v754 = vunpack.c.l.b16 %v567
  %v755 = vunpack.c.h.b16 %v567
  %v756 = vunpack.c.l.b16 %v568
  %v757 = vunpack.c.h.b16 %v568
  %v758 = vunpack.c.l.b16 %v569
  %v759 = vunpack.c.h.b16 %v569
  %v760 = vunpack.c.l.b16 %v570
  %v761 = vunpack.c.h.b16 %v570
  %v762 = vunpack.c.l.b16 %v571
  %v763 = vunpack.c.h.b16 %v571
  %v764 = vpack.c.b16 %v638, %v636
  %v765 = vpack.c.b16 %v639, %v637
  %v766 = vpack.c.b16 %v642, %v640
  %v767 = vpack.c.b16 %v643, %v641
  %v768 = vpack.c.b16 %v646, %v644
  %v769 = vpack.c.b16 %v647, %v645
  %v770 = vpack.c.b16 %v650, %v648
  %v771 = vpack.c.b16 %v651, %v649
  %v772 = vpack.c.b16 %v654, %v652
  %v773 = vpack.c.b16 %v655, %v653
  %v774 = vpack.c.b16 %v658, %v656
  %v775 = vpack.c.b16 %v659, %v657
  %v776 = vpack.c.b16 %v662, %v660
  %v777 = vpack.c.b16 %v663, %v661
  %v778 = vpack.c.b16 %v666, %v664
  %v779 = vpack.c.b16 %v667, %v665
  %v780 = vpack.c.b16 %v670, %v668
  %v781 = vpack.c.b16 %v671, %v669
  %v782 = vpack.c.b16 %v674, %v672
  %v783 = vpack.c.b16 %v675, %v673
  %v784 = vpack.c.b16 %v678, %v676
  %v785 = vpack.c.b16 %v679, %v677
  %v786 = vpack.c.b16 %v682, %v680
  %v787 = vpack.c.b16 %v683, %v681
  %v788 = vpack.c.b16 %v686, %v684
  %v789 = vpack.c.b16 %v687, %v685
  %v790 = vpack.c.b16 %v690, %v688
  %v791 = vpack.c.b16 %v691, %v689
  %v792 = vpack.c.b16 %v694, %v692
  %v793 = vpack.c.b16 %v695, %v693
  %v794 = vpack.c.b16 %v698, %v696
  %v795 = vpack.c.b16 %v699, %v697
  %v796 = vpack.c.b16 %v702, %v700
  %v797 = vpack.c.b16 %v703, %v701
  %v798 = vpack.c.b16 %v706, %v704
  %v799 = vpack.c.b16 %v707, %v705
  %v800 = vpack.c.b16 %v710, %v708
  %v801 = vpack.c.b16 %v711, %v709
  %v802 = vpack.c.b16 %v714, %v712
  %v803 = vpack.c.b16 %v715, %v713
  %v804 = vpack.c.b16 %v718, %v716
  %v805 = vpack.c.b16 %v719, %v717
  %v806 = vpack.c.b16 %v722, %v720
  %v807 = vpack.c.b16 %v723, %v721
  %v808 = vpack.c.b16 %v726, %v724
  %v809 = vpack.c.b16 %v727, %v725
  %v810 = vpack.c.b16 %v730, %v728
  %v811 = vpack.c.b16 %v731, %v729
  %v812 = vpack.c.b16 %v734, %v732
  %v813 = vpack.c.b16 %v735, %v733
  %v814 = vpack.c.b16 %v738, %v736
  %v815 = vpack.c.b16 %v739, %v737
  %v816 = vpack.c.b16 %v742, %v740
  %v817 = vpack.c.b16 %v743, %v741
  %v818 = vpack.c.b16 %v746, %v744
  %v819 = vpack.c.b16 %v747, %v745
  %v820 = vpack.c.b16 %v750, %v748
  %v821 = vpack.c.b16 %v751, %v749
  %v822 = vpack.c.b16 %v754, %v752
  %v823 = vpack.c.b16 %v755, %v753
  %v824 = vpack.c.b16 %v758, %v756
  %v825 = vpack.c.b16 %v759, %v757
  %v826 = vpack.c.b16 %v762, %v760
  %v827 = vpack.c.b16 %v763, %v761
  %892 = vmatprep.subr.bf16.mxu0 %v765
  %893 = vmatpush1.bf16.msra.mxu0 %v764
  %894 = vmatprep.subr.bf16.mxu0 %v767
  %895 = vmatpush1.bf16.msra.mxu0 %v766
  %896 = vmatprep.subr.bf16.mxu0 %v769
  %897 = vmatpush1.bf16.msra.mxu0 %v768
  %898 = vmatprep.subr.bf16.mxu0 %v771
  %899 = vmatpush1.bf16.msra.mxu0 %v770
  %900 = vmatprep.subr.bf16.mxu0 %v773
  %901 = vmatpush1.bf16.msra.mxu0 %v772
  %902 = vmatprep.subr.bf16.mxu0 %v775
  %903 = vmatpush1.bf16.msra.mxu0 %v774
  %904 = vmatprep.subr.bf16.mxu0 %v777
  %905 = vmatpush1.bf16.msra.mxu0 %v776
  %906 = vmatprep.subr.bf16.mxu0 %v779
  %907 = vmatpush1.bf16.msra.mxu0 %v778
  %908 = vmatprep.subr.bf16.mxu0 %v781
  %909 = vmatpush1.bf16.msra.mxu0 %v780
  %910 = vmatprep.subr.bf16.mxu0 %v783
  %911 = vmatpush1.bf16.msra.mxu0 %v782
  %912 = vmatprep.subr.bf16.mxu0 %v785
  %913 = vmatpush1.bf16.msra.mxu0 %v784
  %914 = vmatprep.subr.bf16.mxu0 %v787
  %915 = vmatpush1.bf16.msra.mxu0 %v786
  %916 = vmatprep.subr.bf16.mxu0 %v789
  %917 = vmatpush1.bf16.msra.mxu0 %v788
  %918 = vmatprep.subr.bf16.mxu0 %v791
  %919 = vmatpush1.bf16.msra.mxu0 %v790
  %920 = vmatprep.subr.bf16.mxu0 %v793
  %921 = vmatpush1.bf16.msra.mxu0 %v792
  %922 = vmatprep.subr.bf16.mxu0 %v795
  %923 = vmatpush1.bf16.msra.mxu0 %v794
  %924 = vmatprep.mubr.bf16.mxu0 %v477
  %925 = vmatmul.mubr.bf16.gmra.mrb[0].mxu0 %v476
  %v926 = vpop.f32.mrb[0].mxu0
  %v927 = vadd.f32 0.0, %v926
  %v928 = vpop.f32.mrb[0].mxu0
  %v929 = vadd.f32 0.0, %v928
  %v930 = vpop.f32.mrb[0].mxu0
  %v931 = vadd.f32 0.0, %v930
  %v932 = vpop.f32.mrb[0].mxu0
  %v933 = vadd.f32 0.0, %v932
  %934 = vmatprep.mubr.bf16.mxu0 %v481
  %935 = vmatmul.mubr.bf16.gmra.mrb[0].mxu0 %v480
  %v936 = vpop.f32.mrb[0].mxu0
  %v937 = vadd.f32 0.0, %v936
  %v938 = vpop.f32.mrb[0].mxu0
  %v939 = vadd.f32 0.0, %v938
  %v940 = vpop.f32.mrb[0].mxu0
  %v941 = vadd.f32 0.0, %v940
  %v942 = vpop.f32.mrb[0].mxu0
  %v943 = vadd.f32 0.0, %v942
  %944 = vmatprep.mubr.bf16.mxu0 %v485
  %945 = vmatmul.mubr.bf16.gmra.mrb[0].mxu0 %v484
  %v946 = vpop.f32.mrb[0].mxu0
  %v947 = vadd.f32 0.0, %v946
  %v948 = vpop.f32.mrb[0].mxu0
  %v949 = vadd.f32 0.0, %v948
  %v950 = vpop.f32.mrb[0].mxu0
  %v951 = vadd.f32 0.0, %v950
  %v952 = vpop.f32.mrb[0].mxu0
  %v953 = vadd.f32 0.0, %v952
  %954 = vmatprep.mubr.bf16.mxu0 %v489
  %955 = vmatmul.mubr.bf16.gmra.mrb[0].mxu0 %v488
  %v956 = vpop.f32.mrb[0].mxu0
  %v957 = vadd.f32 0.0, %v956
  %v958 = vpop.f32.mrb[0].mxu0
  %v959 = vadd.f32 0.0, %v958
  %v960 = vpop.f32.mrb[0].mxu0
  %v961 = vadd.f32 0.0, %v960
  %v962 = vpop.f32.mrb[0].mxu0
  %v963 = vadd.f32 0.0, %v962
  %964 = vmatprep.mubr.bf16.mxu0 %v493
  %965 = vmatmul.mubr.bf16.gmra.mrb[0].mxu0 %v492
  %v966 = vpop.f32.mrb[0].mxu0
  %v967 = vadd.f32 0.0, %v966
  %v968 = vpop.f32.mrb[0].mxu0
  %v969 = vadd.f32 0.0, %v968
  %v970 = vpop.f32.mrb[0].mxu0
  %v971 = vadd.f32 0.0, %v970
  %v972 = vpop.f32.mrb[0].mxu0
  %v973 = vadd.f32 0.0, %v972
  %974 = vmatprep.mubr.bf16.mxu0 %v497
  %975 = vmatmul.mubr.bf16.gmra.mrb[0].mxu0 %v496
  %v976 = vpop.f32.mrb[0].mxu0
  %v977 = vadd.f32 0.0, %v976
  %v978 = vpop.f32.mrb[0].mxu0
  %v979 = vadd.f32 0.0, %v978
  %v980 = vpop.f32.mrb[0].mxu0
  %v981 = vadd.f32 0.0, %v980
  %v982 = vpop.f32.mrb[0].mxu0
  %v983 = vadd.f32 0.0, %v982
  %984 = vmatprep.mubr.bf16.mxu0 %v501
  %985 = vmatmul.mubr.bf16.gmra.mrb[0].mxu0 %v500
  %v986 = vpop.f32.mrb[0].mxu0
  %v987 = vadd.f32 0.0, %v986
  %v988 = vpop.f32.mrb[0].mxu0
  %v989 = vadd.f32 0.0, %v988
  %v990 = vpop.f32.mrb[0].mxu0
  %v991 = vadd.f32 0.0, %v990
  %v992 = vpop.f32.mrb[0].mxu0
  %v993 = vadd.f32 0.0, %v992
  %994 = vmatprep.mubr.bf16.mxu0 %v505
  %995 = vmatmul.mubr.bf16.gmra.mrb[0].mxu0 %v504
  %v996 = vpop.f32.mrb[0].mxu0
  %v997 = vadd.f32 0.0, %v996
  %v998 = vpop.f32.mrb[0].mxu0
  %v999 = vadd.f32 0.0, %v998
  %v1000 = vpop.f32.mrb[0].mxu0
  %v1001 = vadd.f32 0.0, %v1000
  %v1002 = vpop.f32.mrb[0].mxu0
  %v1003 = vadd.f32 0.0, %v1002
  %1004 = vdwg.mxu0
  %1005 = vmatprep.subr.bf16.mxu0 %v797
  %1006 = vmatpush1.bf16.msra.mxu0 %v796
  %1007 = vmatprep.subr.bf16.mxu0 %v799
  %1008 = vmatpush1.bf16.msra.mxu0 %v798
  %1009 = vmatprep.subr.bf16.mxu0 %v801
  %1010 = vmatpush1.bf16.msra.mxu0 %v800
  %1011 = vmatprep.subr.bf16.mxu0 %v803
  %1012 = vmatpush1.bf16.msra.mxu0 %v802
  %1013 = vmatprep.subr.bf16.mxu0 %v805
  %1014 = vmatpush1.bf16.msra.mxu0 %v804
  %1015 = vmatprep.subr.bf16.mxu0 %v807
  %1016 = vmatpush1.bf16.msra.mxu0 %v806
  %1017 = vmatprep.subr.bf16.mxu0 %v809
  %1018 = vmatpush1.bf16.msra.mxu0 %v808
  %1019 = vmatprep.subr.bf16.mxu0 %v811
  %1020 = vmatpush1.bf16.msra.mxu0 %v810
  %1021 = vmatprep.subr.bf16.mxu0 %v813
  %1022 = vmatpush1.bf16.msra.mxu0 %v812
  %1023 = vmatprep.subr.bf16.mxu0 %v815
  %1024 = vmatpush1.bf16.msra.mxu0 %v814
  %1025 = vmatprep.subr.bf16.mxu0 %v817
  %1026 = vmatpush1.bf16.msra.mxu0 %v816
  %1027 = vmatprep.subr.bf16.mxu0 %v819
  %1028 = vmatpush1.bf16.msra.mxu0 %v818
  %1029 = vmatprep.subr.bf16.mxu0 %v821
  %1030 = vmatpush1.bf16.msra.mxu0 %v820
  %1031 = vmatprep.subr.bf16.mxu0 %v823
  %1032 = vmatpush1.bf16.msra.mxu0 %v822
  %1033 = vmatprep.subr.bf16.mxu0 %v825
  %1034 = vmatpush1.bf16.msra.mxu0 %v824
  %1035 = vmatprep.subr.bf16.mxu0 %v827
  %1036 = vmatpush1.bf16.msra.mxu0 %v826
  %1037 = vmatprep.mubr.bf16.mxu0 %v479
  %1038 = vmatmul.mubr.bf16.gmra.mrb[0].mxu0 %v478
  %v1039 = vpop.f32.mrb[0].mxu0
  %v1040 = vadd.f32 %v927, %v1039
  %v1041 = vpop.f32.mrb[0].mxu0
  %v1042 = vadd.f32 %v929, %v1041
  %v1043 = vpop.f32.mrb[0].mxu0
  %v1044 = vadd.f32 %v931, %v1043
  %v1045 = vpop.f32.mrb[0].mxu0
  %v1046 = vadd.f32 %v933, %v1045
  %1047 = vmatprep.mubr.bf16.mxu0 %v483
  %1048 = vmatmul.mubr.bf16.gmra.mrb[0].mxu0 %v482
  %v1049 = vpop.f32.mrb[0].mxu0
  %v1050 = vadd.f32 %v937, %v1049
  %v1051 = vpop.f32.mrb[0].mxu0
  %v1052 = vadd.f32 %v939, %v1051
  %v1053 = vpop.f32.mrb[0].mxu0
  %v1054 = vadd.f32 %v941, %v1053
  %v1055 = vpop.f32.mrb[0].mxu0
  %v1056 = vadd.f32 %v943, %v1055
  %1057 = vmatprep.mubr.bf16.mxu0 %v487
  %1058 = vmatmul.mubr.bf16.gmra.mrb[0].mxu0 %v486
  %v1059 = vpop.f32.mrb[0].mxu0
  %v1060 = vadd.f32 %v947, %v1059
  %v1061 = vpop.f32.mrb[0].mxu0
  %v1062 = vadd.f32 %v949, %v1061
  %v1063 = vpop.f32.mrb[0].mxu0
  %v1064 = vadd.f32 %v951, %v1063
  %v1065 = vpop.f32.mrb[0].mxu0
  %v1066 = vadd.f32 %v953, %v1065
  %1067 = vmatprep.mubr.bf16.mxu0 %v491
  %1068 = vmatmul.mubr.bf16.gmra.mrb[0].mxu0 %v490
  %v1069 = vpop.f32.mrb[0].mxu0
  %v1070 = vadd.f32 %v957, %v1069
  %v1071 = vpop.f32.mrb[0].mxu0
  %v1072 = vadd.f32 %v959, %v1071
  %v1073 = vpop.f32.mrb[0].mxu0
  %v1074 = vadd.f32 %v961, %v1073
  %v1075 = vpop.f32.mrb[0].mxu0
  %v1076 = vadd.f32 %v963, %v1075
  %1077 = vmatprep.mubr.bf16.mxu0 %v495
  %1078 = vmatmul.mubr.bf16.gmra.mrb[0].mxu0 %v494
  %v1079 = vpop.f32.mrb[0].mxu0
  %v1080 = vadd.f32 %v967, %v1079
  %v1081 = vpop.f32.mrb[0].mxu0
  %v1082 = vadd.f32 %v969, %v1081
  %v1083 = vpop.f32.mrb[0].mxu0
  %v1084 = vadd.f32 %v971, %v1083
  %v1085 = vpop.f32.mrb[0].mxu0
  %v1086 = vadd.f32 %v973, %v1085
  %1087 = vmatprep.mubr.bf16.mxu0 %v499
  %1088 = vmatmul.mubr.bf16.gmra.mrb[0].mxu0 %v498
  %v1089 = vpop.f32.mrb[0].mxu0
  %v1090 = vadd.f32 %v977, %v1089
  %v1091 = vpop.f32.mrb[0].mxu0
  %v1092 = vadd.f32 %v979, %v1091
  %v1093 = vpop.f32.mrb[0].mxu0
  %v1094 = vadd.f32 %v981, %v1093
  %v1095 = vpop.f32.mrb[0].mxu0
  %v1096 = vadd.f32 %v983, %v1095
  %1097 = vmatprep.mubr.bf16.mxu0 %v503
  %1098 = vmatmul.mubr.bf16.gmra.mrb[0].mxu0 %v502
  %v1099 = vpop.f32.mrb[0].mxu0
  %v1100 = vadd.f32 %v987, %v1099
  %v1101 = vpop.f32.mrb[0].mxu0
  %v1102 = vadd.f32 %v989, %v1101
  %v1103 = vpop.f32.mrb[0].mxu0
  %v1104 = vadd.f32 %v991, %v1103
  %v1105 = vpop.f32.mrb[0].mxu0
  %v1106 = vadd.f32 %v993, %v1105
  %1107 = vmatprep.mubr.bf16.mxu0 %v507
  %1108 = vmatmul.mubr.bf16.gmra.mrb[0].mxu0 %v506
  %v1109 = vpop.f32.mrb[0].mxu0
  %v1110 = vadd.f32 %v997, %v1109
  %v1111 = vpop.f32.mrb[0].mxu0
  %v1112 = vadd.f32 %v999, %v1111
  %v1113 = vpop.f32.mrb[0].mxu0
  %v1114 = vadd.f32 %v1001, %v1113
  %v1115 = vpop.f32.mrb[0].mxu0
  %v1116 = vadd.f32 %v1003, %v1115
  %1117 = vdwg.mxu0
  %v1118 = vpack.c.bf16 %v1044, %v1040
  %v1119 = vpack.c.bf16 %v1046, %v1042
  %v1120 = vpack.c.bf16 %v1054, %v1050
  %v1121 = vpack.c.bf16 %v1056, %v1052
  %v1122 = vpack.c.bf16 %v1064, %v1060
  %v1123 = vpack.c.bf16 %v1066, %v1062
  %v1124 = vpack.c.bf16 %v1074, %v1070
  %v1125 = vpack.c.bf16 %v1076, %v1072
  %v1126 = vpack.c.bf16 %v1084, %v1080
  %v1127 = vpack.c.bf16 %v1086, %v1082
  %v1128 = vpack.c.bf16 %v1094, %v1090
  %v1129 = vpack.c.bf16 %v1096, %v1092
  %v1130 = vpack.c.bf16 %v1104, %v1100
  %v1131 = vpack.c.bf16 %v1106, %v1102
  %v1132 = vpack.c.bf16 %v1114, %v1110
  %v1133 = vpack.c.bf16 %v1116, %v1112
  %v1134 = vld [vmem:[%s4] sm:$0x3]
  %v1137 = vunpack.c.l.s4 1966171168
  %v1138 = vunpack.c.0.s8 %v1137
  %v1139 = vlaneseq
  %v1140 = vshrl.u32 %v1139, 7
  %v1141 = vsub.s32 %v1138, %v1140
  %v1142 = vrot.slane %v1134, %v1141
  %v1143 = vcombine.high %v1142, %v1142
  %v1145 = vunpack.c.l.s4 1966171168
  %v1146 = vunpack.c.0.s8 %v1145
  %v1147 = vlaneseq
  %v1148 = vshrl.u32 %v1147, 7
  %v1149 = vsub.s32 %v1146, %v1148
  %v1150 = vrot.slane %v1142, %v1149
  %v1152 = vunpack.c.l.s4 1966171168
  %v1153 = vunpack.c.0.s8 %v1152
  %v1154 = vlaneseq
  %v1155 = vshrl.u32 %v1154, 7
  %v1156 = vsub.s32 %v1153, %v1155
  %v1157 = vrot.slane %v1143, %v1156
  %v1159 = vpack.i.b16 %v1150, %v1150
  %v1161 = vlaneseq
  %v1162 = vshrl.u32 %v1161, 7
  %v1163 = vsub.s32 0, %v1162
  %v1164 = vrot.slane %v1159, %v1163
  %v1166 = vpack.i.b16 %v1157, %v1157
  %v1168 = vlaneseq
  %v1169 = vshrl.u32 %v1168, 7
  %v1170 = vsub.s32 0, %v1169
  %v1171 = vrot.slane %v1166, %v1170
  %v1172 = vadd.bf16 %v1118, %v1164
  %v1173 = vadd.bf16 %v1119, %v1171
  %v1174 = vadd.bf16 %v1120, %v1164
  %v1175 = vadd.bf16 %v1121, %v1171
  %v1176 = vadd.bf16 %v1122, %v1164
  %v1177 = vadd.bf16 %v1123, %v1171
  %v1178 = vadd.bf16 %v1124, %v1164
  %v1179 = vadd.bf16 %v1125, %v1171
  %v1180 = vadd.bf16 %v1126, %v1164
  %v1181 = vadd.bf16 %v1127, %v1171
  %v1182 = vadd.bf16 %v1128, %v1164
  %v1183 = vadd.bf16 %v1129, %v1171
  %v1184 = vadd.bf16 %v1130, %v1164
  %v1185 = vadd.bf16 %v1131, %v1171
  %v1186 = vadd.bf16 %v1132, %v1164
  %v1187 = vadd.bf16 %v1133, %v1171
  %v1188 = vmax.bf16 %v1172, 0
  %v1189 = vmax.bf16 %v1173, 0
  %v1190 = vmax.bf16 %v1174, 0
  %v1191 = vmax.bf16 %v1175, 0
  %v1192 = vmax.bf16 %v1176, 0
  %v1193 = vmax.bf16 %v1177, 0
  %v1194 = vmax.bf16 %v1178, 0
  %v1195 = vmax.bf16 %v1179, 0
  %v1196 = vmax.bf16 %v1180, 0
  %v1197 = vmax.bf16 %v1181, 0
  %v1198 = vmax.bf16 %v1182, 0
  %v1199 = vmax.bf16 %v1183, 0
  %v1200 = vmax.bf16 %v1184, 0
  %v1201 = vmax.bf16 %v1185, 0
  %v1202 = vmax.bf16 %v1186, 0
  %v1203 = vmax.bf16 %v1187, 0
  %v1204 = vld [vmem:[%s5] sm:$0xf]
  %v1205 = vld [vmem:[%s5 + $0x4] sm:$0xf]
  %v1206 = vld [vmem:[%s5 + $0x8] sm:$0xf]
  %v1207 = vld [vmem:[%s5 + $0xc] sm:$0xf]
  %v1208 = vld [vmem:[%s5 + $0x10] sm:$0xf]
  %v1209 = vld [vmem:[%s5 + $0x14] sm:$0xf]
  %v1210 = vld [vmem:[%s5 + $0x18] sm:$0xf]
  %v1211 = vld [vmem:[%s5 + $0x1c] sm:$0xf]
  %v1212 = vld [vmem:[%s5 + $0x20] sm:$0xf]
  %v1213 = vld [vmem:[%s5 + $0x24] sm:$0xf]
  %v1214 = vld [vmem:[%s5 + $0x28] sm:$0xf]
  %v1215 = vld [vmem:[%s5 + $0x2c] sm:$0xf]
  %v1216 = vld [vmem:[%s5 + $0x30] sm:$0xf]
  %v1217 = vld [vmem:[%s5 + $0x34] sm:$0xf]
  %v1218 = vld [vmem:[%s5 + $0x38] sm:$0xf]
  %v1219 = vld [vmem:[%s5 + $0x3c] sm:$0xf]
  %v1220 = vld [vmem:[%s5 + $0x40] sm:$0xf]
  %v1221 = vld [vmem:[%s5 + $0x44] sm:$0xf]
  %v1222 = vld [vmem:[%s5 + $0x48] sm:$0xf]
  %v1223 = vld [vmem:[%s5 + $0x4c] sm:$0xf]
  %v1224 = vld [vmem:[%s5 + $0x50] sm:$0xf]
  %v1225 = vld [vmem:[%s5 + $0x54] sm:$0xf]
  %v1226 = vld [vmem:[%s5 + $0x58] sm:$0xf]
  %v1227 = vld [vmem:[%s5 + $0x5c] sm:$0xf]
  %v1228 = vld [vmem:[%s5 + $0x60] sm:$0xf]
  %v1229 = vld [vmem:[%s5 + $0x64] sm:$0xf]
  %v1230 = vld [vmem:[%s5 + $0x68] sm:$0xf]
  %v1231 = vld [vmem:[%s5 + $0x6c] sm:$0xf]
  %v1232 = vld [vmem:[%s5 + $0x70] sm:$0xf]
  %v1233 = vld [vmem:[%s5 + $0x74] sm:$0xf]
  %v1234 = vld [vmem:[%s5 + $0x78] sm:$0xf]
  %v1235 = vld [vmem:[%s5 + $0x7c] sm:$0xf]
  %v1236 = vld [vmem:[%s6] sm:$0x1]
  %v1238 = vlaneseq
  %v1239 = vshrl.u32 %v1238, 7
  %v1240 = vsub.s32 0, %v1239
  %v1241 = vrot.slane %v1236, %v1240
  %v1275 = vunpack.c.l.b16 %v1204
  %v1276 = vunpack.c.l.b16 %v1205
  %v1277 = vunpack.c.l.b16 %v1206
  %v1278 = vunpack.c.l.b16 %v1207
  %v1279 = vunpack.c.l.b16 %v1208
  %v1280 = vunpack.c.l.b16 %v1209
  %v1281 = vunpack.c.l.b16 %v1210
  %v1282 = vunpack.c.l.b16 %v1211
  %v1283 = vunpack.c.l.b16 %v1212
  %v1284 = vunpack.c.l.b16 %v1213
  %v1285 = vunpack.c.l.b16 %v1214
  %v1286 = vunpack.c.l.b16 %v1215
  %v1287 = vunpack.c.l.b16 %v1216
  %v1288 = vunpack.c.l.b16 %v1217
  %v1289 = vunpack.c.l.b16 %v1218
  %v1290 = vunpack.c.l.b16 %v1219
  %v1291 = vunpack.c.l.b16 %v1220
  %v1292 = vunpack.c.l.b16 %v1221
  %v1293 = vunpack.c.l.b16 %v1222
  %v1294 = vunpack.c.l.b16 %v1223
  %v1295 = vunpack.c.l.b16 %v1224
  %v1296 = vunpack.c.l.b16 %v1225
  %v1297 = vunpack.c.l.b16 %v1226
  %v1298 = vunpack.c.l.b16 %v1227
  %v1299 = vunpack.c.l.b16 %v1228
  %v1300 = vunpack.c.l.b16 %v1229
  %v1301 = vunpack.c.l.b16 %v1230
  %v1302 = vunpack.c.l.b16 %v1231
  %v1303 = vunpack.c.l.b16 %v1232
  %v1304 = vunpack.c.l.b16 %v1233
  %v1305 = vunpack.c.l.b16 %v1234
  %v1306 = vunpack.c.l.b16 %v1235
  %v1307 = vpack.c.b16 %v1276, %v1275
  %v1308 = vpack.c.b16 %v1278, %v1277
  %v1309 = vpack.c.b16 %v1280, %v1279
  %v1310 = vpack.c.b16 %v1282, %v1281
  %v1311 = vpack.c.b16 %v1284, %v1283
  %v1312 = vpack.c.b16 %v1286, %v1285
  %v1313 = vpack.c.b16 %v1288, %v1287
  %v1314 = vpack.c.b16 %v1290, %v1289
  %v1315 = vpack.c.b16 %v1292, %v1291
  %v1316 = vpack.c.b16 %v1294, %v1293
  %v1317 = vpack.c.b16 %v1296, %v1295
  %v1318 = vpack.c.b16 %v1298, %v1297
  %v1319 = vpack.c.b16 %v1300, %v1299
  %v1320 = vpack.c.b16 %v1302, %v1301
  %v1321 = vpack.c.b16 %v1304, %v1303
  %v1322 = vpack.c.b16 %v1306, %v1305
  %1339 = vmatprep.subr.bf16.mxu0 0
  %1340 = vmatpush1.bf16.msra.mxu0 %v1307
  %1341 = vmatprep.subr.bf16.mxu0 0
  %1342 = vmatpush1.bf16.msra.mxu0 %v1308
  %1343 = vmatprep.subr.bf16.mxu0 0
  %1344 = vmatpush1.bf16.msra.mxu0 %v1309
  %1345 = vmatprep.subr.bf16.mxu0 0
  %1346 = vmatpush1.bf16.msra.mxu0 %v1310
  %1347 = vmatprep.subr.bf16.mxu0 0
  %1348 = vmatpush1.bf16.msra.mxu0 %v1311
  %1349 = vmatprep.subr.bf16.mxu0 0
  %1350 = vmatpush1.bf16.msra.mxu0 %v1312
  %1351 = vmatprep.subr.bf16.mxu0 0
  %1352 = vmatpush1.bf16.msra.mxu0 %v1313
  %1353 = vmatprep.subr.bf16.mxu0 0
  %1354 = vmatpush1.bf16.msra.mxu0 %v1314
  %1355 = vmatprep.subr.bf16.mxu0 0
  %1356 = vmatpush1.bf16.msra.mxu0 %v1315
  %1357 = vmatprep.subr.bf16.mxu0 0
  %1358 = vmatpush1.bf16.msra.mxu0 %v1316
  %1359 = vmatprep.subr.bf16.mxu0 0
  %1360 = vmatpush1.bf16.msra.mxu0 %v1317
  %1361 = vmatprep.subr.bf16.mxu0 0
  %1362 = vmatpush1.bf16.msra.mxu0 %v1318
  %1363 = vmatprep.subr.bf16.mxu0 0
  %1364 = vmatpush1.bf16.msra.mxu0 %v1319
  %1365 = vmatprep.subr.bf16.mxu0 0
  %1366 = vmatpush1.bf16.msra.mxu0 %v1320
  %1367 = vmatprep.subr.bf16.mxu0 0
  %1368 = vmatpush1.bf16.msra.mxu0 %v1321
  %1369 = vmatprep.subr.bf16.mxu0 0
  %1370 = vmatpush1.bf16.msra.mxu0 %v1322
  %1371 = vmatprep.mubr.bf16.mxu0 %v1189
  %1372 = vmatmul.mubr.bf16.gmra.mrb[0].mxu0 %v1188
  %v1373 = vpop.f32.mrb[0].mxu0
  %v1374 = vadd.f32 %v1241, %v1373
  %v1375 = vpop.f32.mrb[0].mxu0
  %v1376 = vpop.f32.mrb[0].mxu0
  %v1377 = vadd.f32 %v1241, %v1376
  %v1378 = vpop.f32.mrb[0].mxu0
  %1379 = vmatprep.mubr.bf16.mxu0 %v1191
  %1380 = vmatmul.mubr.bf16.gmra.mrb[0].mxu0 %v1190
  %v1381 = vpop.f32.mrb[0].mxu0
  %v1382 = vadd.f32 %v1241, %v1381
  %v1383 = vpop.f32.mrb[0].mxu0
  %v1384 = vpop.f32.mrb[0].mxu0
  %v1385 = vadd.f32 %v1241, %v1384
  %v1386 = vpop.f32.mrb[0].mxu0
  %1387 = vmatprep.mubr.bf16.mxu0 %v1193
  %1388 = vmatmul.mubr.bf16.gmra.mrb[0].mxu0 %v1192
  %v1389 = vpop.f32.mrb[0].mxu0
  %v1390 = vadd.f32 %v1241, %v1389
  %v1391 = vpop.f32.mrb[0].mxu0
  %v1392 = vpop.f32.mrb[0].mxu0
  %v1393 = vadd.f32 %v1241, %v1392
  %v1394 = vpop.f32.mrb[0].mxu0
  %1395 = vmatprep.mubr.bf16.mxu0 %v1195
  %1396 = vmatmul.mubr.bf16.gmra.mrb[0].mxu0 %v1194
  %v1397 = vpop.f32.mrb[0].mxu0
  %v1398 = vadd.f32 %v1241, %v1397
  %v1399 = vpop.f32.mrb[0].mxu0
  %v1400 = vpop.f32.mrb[0].mxu0
  %v1401 = vadd.f32 %v1241, %v1400
  %v1402 = vpop.f32.mrb[0].mxu0
  %1403 = vmatprep.mubr.bf16.mxu0 %v1197
  %1404 = vmatmul.mubr.bf16.gmra.mrb[0].mxu0 %v1196
  %v1405 = vpop.f32.mrb[0].mxu0
  %v1406 = vadd.f32 %v1241, %v1405
  %v1407 = vpop.f32.mrb[0].mxu0
  %v1408 = vpop.f32.mrb[0].mxu0
  %v1409 = vadd.f32 %v1241, %v1408
  %v1410 = vpop.f32.mrb[0].mxu0
  %1411 = vmatprep.mubr.bf16.mxu0 %v1199
  %1412 = vmatmul.mubr.bf16.gmra.mrb[0].mxu0 %v1198
  %v1413 = vpop.f32.mrb[0].mxu0
  %v1414 = vadd.f32 %v1241, %v1413
  %v1415 = vpop.f32.mrb[0].mxu0
  %v1416 = vpop.f32.mrb[0].mxu0
  %v1417 = vadd.f32 %v1241, %v1416
  %v1418 = vpop.f32.mrb[0].mxu0
  %1419 = vmatprep.mubr.bf16.mxu0 %v1201
  %1420 = vmatmul.mubr.bf16.gmra.mrb[0].mxu0 %v1200
  %v1421 = vpop.f32.mrb[0].mxu0
  %v1422 = vadd.f32 %v1241, %v1421
  %v1423 = vpop.f32.mrb[0].mxu0
  %v1424 = vpop.f32.mrb[0].mxu0
  %v1425 = vadd.f32 %v1241, %v1424
  %v1426 = vpop.f32.mrb[0].mxu0
  %1427 = vmatprep.mubr.bf16.mxu0 %v1203
  %1428 = vmatmul.mubr.bf16.gmra.mrb[0].mxu0 %v1202
  %v1429 = vpop.f32.mrb[0].mxu0
  %v1430 = vadd.f32 %v1241, %v1429
  %v1431 = vpop.f32.mrb[0].mxu0
  %v1432 = vpop.f32.mrb[0].mxu0
  %v1433 = vadd.f32 %v1241, %v1432
  %v1434 = vpop.f32.mrb[0].mxu0
  %1435 = vdwg.mxu0
  %v1436 = vmax.f32 %v1374, 0.0
  %v1437 = vmax.f32 %v1377, 0.0
  %v1438 = vmax.f32 %v1382, 0.0
  %v1439 = vmax.f32 %v1385, 0.0
  %v1440 = vmax.f32 %v1390, 0.0
  %v1441 = vmax.f32 %v1393, 0.0
  %v1442 = vmax.f32 %v1398, 0.0
  %v1443 = vmax.f32 %v1401, 0.0
  %v1444 = vmax.f32 %v1406, 0.0
  %v1445 = vmax.f32 %v1409, 0.0
  %v1446 = vmax.f32 %v1414, 0.0
  %v1447 = vmax.f32 %v1417, 0.0
  %v1448 = vmax.f32 %v1422, 0.0
  %v1449 = vmax.f32 %v1425, 0.0
  %v1450 = vmax.f32 %v1430, 0.0
  %v1451 = vmax.f32 %v1433, 0.0
  %v1452 = vld [vmem:[%s7] sm:$0x1]
  %v1453 = vld [vmem:[#allocation2] sm:$0x1]
  %1455 = vset.pattern.permute.xlu0 0
  %1456 = vperm.xlu0 %1455, %v1453
  %v1457 = vpop.permute.xlu0 %1456
  %v1459 = vlaneseq
  %v1460 = vshrl.u32 %v1459, 7
  %v1461 = vsub.s32 0, %v1460
  %v1462 = vrot.slane %v1457, %v1461
  %vm1463 = vcmask 523264
  %v1465 = vsel %vm1463, %v1452, 0
  %v1468 = vsel %vm1463, %v1436, 0
  %v1471 = vsel %vm1463, %v1437, 0
  %v1474 = vsel %vm1463, %v1438, 0
  %v1477 = vsel %vm1463, %v1439, 0
  %v1480 = vsel %vm1463, %v1440, 0
  %v1483 = vsel %vm1463, %v1441, 0
  %v1486 = vsel %vm1463, %v1442, 0
  %v1489 = vsel %vm1463, %v1443, 0
  %v1492 = vsel %vm1463, %v1444, 0
  %v1495 = vsel %vm1463, %v1445, 0
  %v1498 = vsel %vm1463, %v1446, 0
  %v1501 = vsel %vm1463, %v1447, 0
  %v1504 = vsel %vm1463, %v1448, 0
  %v1507 = vsel %vm1463, %v1449, 0
  %v1510 = vsel %vm1463, %v1450, 0
  %v1513 = vsel %vm1463, %v1451, 0
  %1515 = vmatprep.subr.mxu0 0.0
  %1516 = vmatpush1.xpose.msra.mxu0 %v1468
  %1517 = vmatprep.subr.mxu0 0.0
  %1518 = vmatpush1.xpose.msra.mxu0 %v1471
  %1519 = vmatprep.subr.mxu0 0.0
  %1520 = vmatpush1.xpose.msra.mxu0 %v1474
  %1521 = vmatprep.subr.mxu0 0.0
  %1522 = vmatpush1.xpose.msra.mxu0 %v1477
  %1523 = vmatprep.subr.mxu0 0.0
  %1524 = vmatpush1.xpose.msra.mxu0 %v1480
  %1525 = vmatprep.subr.mxu0 0.0
  %1526 = vmatpush1.xpose.msra.mxu0 %v1483
  %1527 = vmatprep.subr.mxu0 0.0
  %1528 = vmatpush1.xpose.msra.mxu0 %v1486
  %1529 = vmatprep.subr.mxu0 0.0
  %1530 = vmatpush1.xpose.msra.mxu0 %v1489
  %1531 = vmatprep.subr.mxu0 0.0
  %1532 = vmatpush1.xpose.msra.mxu0 %v1492
  %1533 = vmatprep.subr.mxu0 0.0
  %1534 = vmatpush1.xpose.msra.mxu0 %v1495
  %1535 = vmatprep.subr.mxu0 0.0
  %1536 = vmatpush1.xpose.msra.mxu0 %v1498
  %1537 = vmatprep.subr.mxu0 0.0
  %1538 = vmatpush1.xpose.msra.mxu0 %v1501
  %1539 = vmatprep.subr.mxu0 0.0
  %1540 = vmatpush1.xpose.msra.mxu0 %v1504
  %1541 = vmatprep.subr.mxu0 0.0
  %1542 = vmatpush1.xpose.msra.mxu0 %v1507
  %1543 = vmatprep.subr.mxu0 0.0
  %1544 = vmatpush1.xpose.msra.mxu0 %v1510
  %1545 = vmatprep.subr.mxu0 0.0
  %1546 = vmatpush1.xpose.msra.mxu0 %v1513
  %1547 = vmatprep.subr.mxu0 0.0
  %1548 = vmatpush1.xpose.msra.mxu0 0.0
  %1549 = vmatprep.subr.mxu0 0.0
  %1550 = vmatpush1.xpose.msra.mxu0 0.0
  %1551 = vmatprep.subr.mxu0 0.0
  %1552 = vmatpush1.xpose.msra.mxu0 0.0
  %1553 = vmatprep.subr.mxu0 0.0
  %1554 = vmatpush1.xpose.msra.mxu0 0.0
  %1555 = vmatprep.subr.mxu0 0.0
  %1556 = vmatpush1.xpose.msra.mxu0 0.0
  %1557 = vmatprep.subr.mxu0 0.0
  %1558 = vmatpush1.xpose.msra.mxu0 0.0
  %1559 = vmatprep.subr.mxu0 0.0
  %1560 = vmatpush1.xpose.msra.mxu0 0.0
  %1561 = vmatprep.subr.mxu0 0.0
  %1562 = vmatpush1.xpose.msra.mxu0 0.0
  %1563 = vmatprep.subr.mxu0 0.0
  %1564 = vmatpush1.xpose.msra.mxu0 0.0
  %1565 = vmatprep.subr.mxu0 0.0
  %1566 = vmatpush1.xpose.msra.mxu0 0.0
  %1567 = vmatprep.subr.mxu0 0.0
  %1568 = vmatpush1.xpose.msra.mxu0 0.0
  %1569 = vmatprep.subr.mxu0 0.0
  %1570 = vmatpush1.xpose.msra.mxu0 0.0
  %1571 = vmatprep.subr.mxu0 0.0
  %1572 = vmatpush1.xpose.msra.mxu0 0.0
  %1573 = vmatprep.subr.mxu0 0.0
  %1574 = vmatpush1.xpose.msra.mxu0 0.0
  %1575 = vmatprep.subr.mxu0 0.0
  %1576 = vmatpush1.xpose.msra.mxu0 0.0
  %1577 = vmatprep.subr.mxu0 0.0
  %1578 = vmatpush1.xpose.msra.mxu0 0.0
  %1579 = vmatprep.mubr.f32.mxu0 0.0
  %1580 = vmatmul.mubr.f32.gmra.mrb[0].mxu0 %v1465
  %v1581 = vpop.f32.mrb[0].mxu0
  %v1582 = vadd.f32 %v1462, %v1581
  %v1583 = vpop.f32.mrb[0].mxu0
  %1584 = vdwg.mxu0
  %v1585 = vxor.u32 %v1582, 2147483648
  %v1586 = vmul.f32 %v1585, 1.442695
  %v1587 = vpow.pop %v1586
  %v1588 = vadd.f32 %v1587, 1.0
  %v1589 = vrcp.pop %v1588
  %v1590 = vmul.f32 1.0, %v1589
  %1591 = vst [vmem:[%s9] sm:$0x1] %v1590
  // Predicated region
  $region38: #{hit_order_classifier.1} parent=0 // pred_check
    _
  $region39: #{hit_order_classifier.1} parent=0 // pred_check_branch
    %1593 = sbr.rel (0) target = $region41
  $region40: #{hit_order_classifier.1} parent=0 // pred_region
    _
  $region41: #{hit_order_classifier.1} parent=0 // pred_fallthru
    _
  // Predicated region
  $region42: #{hit_order_classifier.1} parent=0 // pred_check
    _
  $region43: #{hit_order_classifier.1} parent=0 // pred_check_branch
    %1595 = sbr.rel (0) target = $region45
  $region44: #{hit_order_classifier.1} parent=0 // pred_region
    _
  $region45: #{hit_order_classifier.1} parent=0 // pred_fallthru
    _

</llo_original>
